<compile_context>
chip_gen: v6e
topology: v6e:2x2x1
jax: 0.10.0
libtpu: 0.0.40
codegen_flags: <defaults>
</compile_context>

<pallas_src>
import functools

import jax
import jax.numpy as jnp
from jax import lax
from jax.experimental import pallas as pl
from jax.experimental.pallas import tpu as pltpu

EPS = 1e-8  # cLN (ChannelwiseLayerNorm) epsilon

# Conservative scratch budget: leaves headroom inside v7x's 64 MiB physical
# VMEM (v5e/v6e have 128 MiB, so this is comfortable everywhere).
_VMEM_BUDGET = 40 * 1024 * 1024


def _seglstm_kernel(x_ref, wih_ref, whh_ref, bias_ref, h0_ref, c0_ref,
                    wproj_ref, bproj_ref, gamma_ref, beta_ref,
                    out_ref, h_out_ref, c_out_ref,
                    gx_ref, hall_ref, *, unroll, mxu_dtype):
    T, Bb, D = x_ref.shape          # time, batch-block, input feature
    H = whh_ref.shape[0]            # hidden size

    # ---------------- Phase 1: hoisted input projection -------------------
    # One big MXU matmul for all time steps: (T*Bb, D) @ (D, 4H) + bias.
    x_all = x_ref[...].reshape(T * Bb, D).astype(mxu_dtype)
    gx_ref[...] = (jnp.dot(x_all, wih_ref[...].astype(mxu_dtype),
                           preferred_element_type=jnp.float32)
                   + bias_ref[...])

    # ---------------- Phase 2: LSTM recurrence -----------------------------
    # h/c live in vregs as fori_loop carry; only hall (needed by phase 3) is
    # stored per step.  W_hh^T is loaded once and kept in registers.
    whh = whh_ref[...].astype(jnp.float32)
    h0 = h0_ref[...].astype(jnp.float32)
    c0 = c0_ref[...].astype(jnp.float32)

    def step(t, carry):
        h, c = carry
        row = pl.multiple_of(t * Bb, Bb)               # sublane-aligned offset
        gates = gx_ref[pl.ds(row, Bb), :] + jnp.dot(
            h, whh, preferred_element_type=jnp.float32)
        # Full-vreg EUP passes, then slice results (PyTorch gate order i,f,g,o).
        sg = jax.nn.sigmoid(gates)
        th = jnp.tanh(gates)
        i = sg[:, 0 * H:1 * H]
        f = sg[:, 1 * H:2 * H]
        g = th[:, 2 * H:3 * H]
        o = sg[:, 3 * H:4 * H]
        c_new = f * c + i * g
        h_new = o * jnp.tanh(c_new)
        hall_ref[pl.ds(row, Bb), :] = h_new            # stash h_t for phase 3
        return (h_new, c_new)

    h_fin, c_fin = lax.fori_loop(0, T, step, (h0, c0), unroll=unroll)
    h_out_ref[...] = h_fin.astype(h_out_ref.dtype)
    c_out_ref[...] = c_fin.astype(c_out_ref.dtype)

    # ---------------- Phase 3: hoisted proj + cLN + residual ---------------
    p = (jnp.dot(hall_ref[...].astype(mxu_dtype),
                 wproj_ref[...].astype(mxu_dtype),
                 preferred_element_type=jnp.float32)
         + bproj_ref[...])                              # (T*Bb, D)
    mean = jnp.mean(p, axis=-1, keepdims=True)
    cen = p - mean
    var = jnp.mean(cen * cen, axis=-1, keepdims=True)
    normed = gamma_ref[...] * cen * lax.rsqrt(var + EPS) + beta_ref[...]
    # TODO(synk): if production D < 128, present a lane-dense (T, Bb*D) output
    # slab instead of (T, Bb, D) to avoid masked partial stores.
    out_ref[...] = (x_ref[...].astype(jnp.float32)
                    + normed.reshape(T, Bb, D)).astype(out_ref.dtype)


def init_params(key, input_size, hidden_size):
    """Deterministic parameter init mirroring the PyTorch module's shapes."""
    D, H = input_size, hidden_size
    k = float(1.0 / (H ** 0.5))
    keys = jax.random.split(key, 6)
    w_ih = jax.random.uniform(keys[0], (4 * H, D), jnp.float32, -k, k)
    w_hh = jax.random.uniform(keys[1], (4 * H, H), jnp.float32, -k, k)
    b_ih = jax.random.uniform(keys[2], (4 * H,), jnp.float32, -k, k)
    b_hh = jax.random.uniform(keys[3], (4 * H,), jnp.float32, -k, k)
    w_proj = jax.random.uniform(keys[4], (D, H), jnp.float32, -k, k)
    b_proj = jax.random.uniform(keys[5], (D,), jnp.float32, -k, k)
    gamma = jnp.ones((D,), jnp.float32)   # cLN gamma init = 1
    beta = jnp.zeros((D,), jnp.float32)   # cLN beta  init = 0
    return dict(
        w_ih_t=jnp.asarray(w_ih.T),                 # (D, 4H)
        w_hh_t=jnp.asarray(w_hh.T),                 # (H, 4H)
        bias=(b_ih + b_hh).reshape(1, 4 * H),       # (1, 4H)
        w_proj_t=jnp.asarray(w_proj.T),             # (H, D)
        b_proj=b_proj.reshape(1, D),                # (1, D)
        gamma=gamma.reshape(1, D),                  # (1, D)
        beta=beta.reshape(1, D),                    # (1, D)
    )


def _target_num_blocks():
    """>=2 parallel batch blocks on dual-TC chips (v7x); 1 on single-TC."""
    try:
        kind = jax.devices()[0].device_kind.lower()
    except Exception:
        return 1
    if "v7" in kind or "7x" in kind:
        return 2
    return 1


def _vmem_bytes(T, block_b, D, H):
    """Rough per-grid-step VMEM footprint of this kernel (f32 everywhere)."""
    f32 = 4
    scratch = T * block_b * (4 * H + H) * f32           # gx + hall
    io_blocks = 2 * 2 * T * block_b * D * f32           # double-buffered x & out
    weights = (D * 4 * H + H * 4 * H + 4 * H + H * D + 3 * D) * f32
    state = 2 * 4 * block_b * H * f32                   # h0/c0/h_out/c_out x2
    return scratch + io_blocks + weights + state


def seglstm_forward(x, params, hc=None, *, block_b=None, unroll=None,
                    mxu_dtype=jnp.float32):
    """x: (B, T, D) batch-first (PyTorch convention). Returns (out, (h, c))."""
    B, T, D = x.shape
    H = params["w_hh_t"].shape[0]
    if hc is None:
        h0 = jnp.zeros((B, H), x.dtype)
        c0 = jnp.zeros((B, H), x.dtype)
    else:
        h0, c0 = hc[0][0], hc[1][0]

    # ----- choose batch blocking (sublane-aligned, device/VMEM aware) ------
    if block_b is None:
        nb_target = _target_num_blocks()
        align = 8 * nb_target
        bp = align * ((B + align - 1) // align)
        block_b = bp // nb_target
    else:
        block_b = int(block_b)
        assert block_b % 8 == 0, "block_b must be a multiple of 8 (sublane alignment)"
        bp = block_b * ((B + block_b - 1) // block_b)
    # Shrink block_b if the T-scaled gx/hall scratch would blow the budget.
    while block_b > 8 and _vmem_bytes(T, block_b, D, H) > _VMEM_BUDGET:
        block_b = max(8, 8 * ((block_b // 2) // 8))
        bp = block_b * ((B + block_b - 1) // block_b)
    nb = bp // block_b

    if bp != B:
        pad = bp - B
        x_p = jnp.pad(x, ((0, pad), (0, 0), (0, 0)))
        h0 = jnp.pad(h0, ((0, pad), (0, 0)))
        c0 = jnp.pad(c0, ((0, pad), (0, 0)))
    else:
        x_p = x

    # time-major inside the kernel (cheap XLA transpose in the wrapper)
    x_tbd = jnp.transpose(x_p, (1, 0, 2))  # (T, Bp, D)

    # Fully unroll the recurrence for small T (gives the scheduler the whole
    # serial chain); partial unroll only for long segments.
    if unroll is None:
        unroll = T if T <= 32 else 8
    unroll = max(1, min(int(unroll), T))

    vmem_limit = int(max(32 << 20,
                         min(_VMEM_BUDGET, 2 * _vmem_bytes(T, block_b, D, H))))

    kernel = functools.partial(_seglstm_kernel, unroll=unroll,
                               mxu_dtype=mxu_dtype)

    def full_spec(shape):
        return pl.BlockSpec(shape, lambda b, _s=shape: tuple(0 for _ in _s))

    out_tbd, h_fin, c_fin = pl.pallas_call(
        kernel,
        grid=(nb,),
        out_shape=(jax.ShapeDtypeStruct((T, bp, D), x.dtype),
                   jax.ShapeDtypeStruct((bp, H), x.dtype),
                   jax.ShapeDtypeStruct((bp, H), x.dtype)),
        in_specs=[
            pl.BlockSpec((T, block_b, D), lambda b: (0, b, 0)),   # x (time-major)
            full_spec((D, 4 * H)),                                # W_ih^T
            full_spec((H, 4 * H)),                                # W_hh^T
            full_spec((1, 4 * H)),                                # b_ih + b_hh
            pl.BlockSpec((block_b, H), lambda b: (b, 0)),         # h0
            pl.BlockSpec((block_b, H), lambda b: (b, 0)),         # c0
            full_spec((H, D)),                                    # W_proj^T
            full_spec((1, D)),                                    # b_proj
            full_spec((1, D)),                                    # gamma
            full_spec((1, D)),                                    # beta
        ],
        out_specs=(
            pl.BlockSpec((T, block_b, D), lambda b: (0, b, 0)),   # out
            pl.BlockSpec((block_b, H), lambda b: (b, 0)),         # h_final
            pl.BlockSpec((block_b, H), lambda b: (b, 0)),         # c_final
        ),
        scratch_shapes=[
            pltpu.VMEM((T * block_b, 4 * H), jnp.float32),  # hoisted gates_x
            pltpu.VMEM((T * block_b, H), jnp.float32),      # all h_t
        ],
        compiler_params=pltpu.CompilerParams(
            dimension_semantics=("parallel",),          # batch blocks independent
            vmem_limit_bytes=vmem_limit,
        ),
    )(x_tbd, params["w_ih_t"], params["w_hh_t"], params["bias"],
      h0, c0, params["w_proj_t"], params["b_proj"],
      params["gamma"], params["beta"])

    out = jnp.transpose(out_tbd[:, :B, :], (1, 0, 2))   # back to (B, T, D)
    return out, (h_fin[:B][None], c_fin[:B][None])


def seglstm_ref(x, params, hc=None):
    """Pure-JAX reference for validation."""
    B, T, D = x.shape
    H = params["w_hh_t"].shape[0]
    if hc is None:
        h = jnp.zeros((B, H), x.dtype)
        c = jnp.zeros((B, H), x.dtype)
    else:
        h, c = hc[0][0], hc[1][0]

    def step(carry, x_t):
        h, c = carry
        gates = x_t @ params["w_ih_t"] + h @ params["w_hh_t"] + params["bias"]
        i, f, g, o = jnp.split(gates, 4, axis=-1)
        i, f, o = jax.nn.sigmoid(i), jax.nn.sigmoid(f), jax.nn.sigmoid(o)
        g = jnp.tanh(g)
        c_new = f * c + i * g
        h_new = o * jnp.tanh(c_new)
        return (h_new, c_new), h_new

    (h, c), hs = lax.scan(step, (h, c), jnp.transpose(x, (1, 0, 2)))
    hs = jnp.transpose(hs, (1, 0, 2))                       # (B, T, H)
    proj = hs @ params["w_proj_t"] + params["b_proj"]       # (B, T, D)
    mean = proj.mean(-1, keepdims=True)
    var = ((proj - mean) ** 2).mean(-1, keepdims=True)
    normed = params["gamma"] * (proj - mean) * lax.rsqrt(var + EPS) + params["beta"]
    return x + normed, (h[None], c[None])


if __name__ == "__main__":
    # small shapes consistent with the module: batch=10 (pads to 16),
    # seq_len=8, input_size=16, hidden_size=32
    B, T, D, H = 10, 8, 16, 32
    key = jax.random.PRNGKey(0)
    kx, kp, kh, kc = jax.random.split(key, 4)
    x = jax.random.normal(kx, (B, T, D), jnp.float32)
    params = init_params(kp, D, H)

    # Path 1: hc=None (zero initial state)
    out, (h, c) = seglstm_forward(x, params, hc=None)
    jax.block_until_ready((out, h, c))
    ref_out, (rh, rc) = seglstm_ref(x, params, hc=None)
    assert out.shape == (B, T, D) and h.shape == (1, B, H) and c.shape == (1, B, H)
    assert jnp.allclose(out, ref_out, atol=1e-4, rtol=1e-4)
    assert jnp.allclose(h, rh, atol=1e-4, rtol=1e-4)
    assert jnp.allclose(c, rc, atol=1e-4, rtol=1e-4)

    # Path 2: user-provided (h0, c0)
    h0 = jax.random.normal(kh, (1, B, H), jnp.float32)
    c0 = jax.random.normal(kc, (1, B, H), jnp.float32)
    out2, (h2, c2) = seglstm_forward(x, params, hc=(h0, c0))
    jax.block_until_ready((out2, h2, c2))
    ref_out2, (rh2, rc2) = seglstm_ref(x, params, hc=(h0, c0))
    assert jnp.allclose(out2, ref_out2, atol=1e-4, rtol=1e-4)
    assert jnp.allclose(h2, rh2, atol=1e-4, rtol=1e-4)
    assert jnp.allclose(c2, rc2, atol=1e-4, rtol=1e-4)

    print("KERNEL_OK")
</pallas_src>

<mosaic_0001>
module attributes {stable_mosaic.version = 11 : i64} {
  func.func @_seglstm_kernel(%arg0: i32, %arg1: memref<8x16x16xf32, #tpu.memory_space<vmem>>, %arg2: memref<16x128xf32, #tpu.memory_space<vmem>>, %arg3: memref<32x128xf32, #tpu.memory_space<vmem>>, %arg4: memref<1x128xf32, #tpu.memory_space<vmem>>, %arg5: memref<16x32xf32, #tpu.memory_space<vmem>>, %arg6: memref<16x32xf32, #tpu.memory_space<vmem>>, %arg7: memref<32x16xf32, #tpu.memory_space<vmem>>, %arg8: memref<1x16xf32, #tpu.memory_space<vmem>>, %arg9: memref<1x16xf32, #tpu.memory_space<vmem>>, %arg10: memref<1x16xf32, #tpu.memory_space<vmem>>, %arg11: memref<8x16x16xf32, #tpu.memory_space<vmem>>, %arg12: memref<16x32xf32, #tpu.memory_space<vmem>>, %arg13: memref<16x32xf32, #tpu.memory_space<vmem>>, %arg14: memref<128x128xf32, #tpu.memory_space<vmem>>, %arg15: memref<128x32xf32, #tpu.memory_space<vmem>>) attributes {dimension_semantics = [#tpu.dimension_semantics<parallel>], iteration_bounds = array<i64: 1>, scalar_prefetch = 0 : i64, scratch_operands = 2 : i64, tpu.core_type = #tpu.core_type<tc>, window_params = [{transform_indices = @transform_0, window_bounds = array<i64: 8, 16, 16>}, {pipeline_mode = #tpu.pipeline_mode<synchronous>, transform_indices = @transform_1, window_bounds = array<i64: 16, 128>}, {pipeline_mode = #tpu.pipeline_mode<synchronous>, transform_indices = @transform_2, window_bounds = array<i64: 32, 128>}, {pipeline_mode = #tpu.pipeline_mode<synchronous>, transform_indices = @transform_3, window_bounds = array<i64: 1, 128>}, {transform_indices = @transform_4, window_bounds = array<i64: 16, 32>}, {transform_indices = @transform_5, window_bounds = array<i64: 16, 32>}, {pipeline_mode = #tpu.pipeline_mode<synchronous>, transform_indices = @transform_6, window_bounds = array<i64: 32, 16>}, {pipeline_mode = #tpu.pipeline_mode<synchronous>, transform_indices = @transform_7, window_bounds = array<i64: 1, 16>}, {pipeline_mode = #tpu.pipeline_mode<synchronous>, transform_indices = @transform_8, window_bounds = array<i64: 1, 16>}, {pipeline_mode = #tpu.pipeline_mode<synchronous>, transform_indices = @transform_9, window_bounds = array<i64: 1, 16>}, {transform_indices = @transform_10, window_bounds = array<i64: 8, 16, 16>}, {transform_indices = @transform_11, window_bounds = array<i64: 16, 32>}, {transform_indices = @transform_12, window_bounds = array<i64: 16, 32>}]} {
    %c0 = arith.constant 0 : index
    %c0_0 = arith.constant 0 : index
    %c0_1 = arith.constant 0 : index
    %0 = vector.load %arg1[%c0, %c0_0, %c0_1] : memref<8x16x16xf32, #tpu.memory_space<vmem>>, vector<8x16x16xf32>
    %1 = vector.shape_cast %0 : vector<8x16x16xf32> to vector<128x16xf32>
    %c0_2 = arith.constant 0 : index
    %c0_3 = arith.constant 0 : index
    %2 = vector.load %arg2[%c0_2, %c0_3] : memref<16x128xf32, #tpu.memory_space<vmem>>, vector<16x128xf32>
    %cst = arith.constant dense<0.000000e+00> : vector<128x128xf32>
    %3 = tpu.matmul %1, %2, %cst {dimension_numbers = #tpu.dot_dimension_numbers<[1], [0], [0], [1], [0, 0, 1, 1], [], []>} : vector<128x16xf32>, vector<16x128xf32>, vector<128x128xf32> -> vector<128x128xf32>
    %c0_4 = arith.constant 0 : index
    %c0_5 = arith.constant 0 : index
    %4 = vector.load %arg4[%c0_4, %c0_5] : memref<1x128xf32, #tpu.memory_space<vmem>>, vector<1x128xf32>
    %5 = vector.broadcast %4 : vector<1x128xf32> to vector<128x128xf32>
    %6 = arith.addf %3, %5 : vector<128x128xf32>
    %c0_6 = arith.constant 0 : index
    %c0_7 = arith.constant 0 : index
    %7 = vector.load %arg14[%c0_6, %c0_7] : memref<128x128xf32, #tpu.memory_space<vmem>>, vector<128x128xf32>
    tpu.vector_store %arg14[%c0_6, %c0_7], %6 {strides = array<i32>} : memref<128x128xf32, #tpu.memory_space<vmem>>, vector<128x128xf32>,
    %c0_8 = arith.constant 0 : index
    %c0_9 = arith.constant 0 : index
    %8 = vector.load %arg3[%c0_8, %c0_9] : memref<32x128xf32, #tpu.memory_space<vmem>>, vector<32x128xf32>
    %c0_10 = arith.constant 0 : index
    %c0_11 = arith.constant 0 : index
    %9 = vector.load %arg5[%c0_10, %c0_11] : memref<16x32xf32, #tpu.memory_space<vmem>>, vector<16x32xf32>
    %c0_12 = arith.constant 0 : index
    %c0_13 = arith.constant 0 : index
    %10 = vector.load %arg6[%c0_12, %c0_13] : memref<16x32xf32, #tpu.memory_space<vmem>>, vector<16x32xf32>
    %c0_i32 = arith.constant 0 : i32
    %c16_i32 = arith.constant 16 : i32
    %11 = arith.muli %c0_i32, %c16_i32 : i32
    %12 = tpu.assume_multiple %11, 16 : i32
    %13 = arith.index_cast %12 : i32 to index
    %c0_14 = arith.constant 0 : index
    %14 = vector.load %arg14[%13, %c0_14] : memref<128x128xf32, #tpu.memory_space<vmem>>, vector<16x128xf32>
    %cst_15 = arith.constant dense<0.000000e+00> : vector<16x128xf32>
    %15 = tpu.matmul %9, %8, %cst_15 {dimension_numbers = #tpu.dot_dimension_numbers<[1], [0], [0], [1], [0, 0, 1, 1], [], []>} : vector<16x32xf32>, vector<32x128xf32>, vector<16x128xf32> -> vector<16x128xf32>
    %16 = arith.addf %14, %15 : vector<16x128xf32>
    %17 = arith.negf %16 : vector<16x128xf32>
    %18 = math.exp %17 : vector<16x128xf32>
    %cst_16 = arith.constant 1.000000e+00 : f32
    %19 = vector.broadcast %cst_16 : f32 to vector<16x128xf32>
    %20 = arith.addf %19, %18 : vector<16x128xf32>
    %21 = arith.divf %19, %20 : vector<16x128xf32>
    %22 = math.tanh %16 : vector<16x128xf32>
    %23 = vector.extract_strided_slice %21 {offsets = [0, 0], sizes = [16, 32], strides = [1, 1]} : vector<16x128xf32> to vector<16x32xf32>
    %24 = vector.extract_strided_slice %21 {offsets = [0, 32], sizes = [16, 32], strides = [1, 1]} : vector<16x128xf32> to vector<16x32xf32>
    %25 = vector.extract_strided_slice %22 {offsets = [0, 64], sizes = [16, 32], strides = [1, 1]} : vector<16x128xf32> to vector<16x32xf32>
    %26 = vector.extract_strided_slice %21 {offsets = [0, 96], sizes = [16, 32], strides = [1, 1]} : vector<16x128xf32> to vector<16x32xf32>
    %27 = arith.mulf %24, %10 : vector<16x32xf32>
    %28 = arith.mulf %23, %25 : vector<16x32xf32>
    %29 = arith.addf %27, %28 : vector<16x32xf32>
    %30 = math.tanh %29 : vector<16x32xf32>
    %31 = arith.mulf %26, %30 : vector<16x32xf32>
    %32 = arith.index_cast %12 : i32 to index
    %c0_17 = arith.constant 0 : index
    %33 = vector.load %arg15[%32, %c0_17] : memref<128x32xf32, #tpu.memory_space<vmem>>, vector<16x32xf32>
    tpu.vector_store %arg15[%32, %c0_17], %31 {strides = array<i32>} : memref<128x32xf32, #tpu.memory_space<vmem>>, vector<16x32xf32>,
    %c1_i32 = arith.constant 1 : i32
    %c16_i32_18 = arith.constant 16 : i32
    %34 = arith.muli %c1_i32, %c16_i32_18 : i32
    %35 = tpu.assume_multiple %34, 16 : i32
    %36 = arith.index_cast %35 : i32 to index
    %c0_19 = arith.constant 0 : index
    %37 = vector.load %arg14[%36, %c0_19] : memref<128x128xf32, #tpu.memory_space<vmem>>, vector<16x128xf32>
    %cst_20 = arith.constant dense<0.000000e+00> : vector<16x128xf32>
    %38 = tpu.matmul %31, %8, %cst_20 {dimension_numbers = #tpu.dot_dimension_numbers<[1], [0], [0], [1], [0, 0, 1, 1], [], []>} : vector<16x32xf32>, vector<32x128xf32>, vector<16x128xf32> -> vector<16x128xf32>
    %39 = arith.addf %37, %38 : vector<16x128xf32>
    %40 = arith.negf %39 : vector<16x128xf32>
    %41 = math.exp %40 : vector<16x128xf32>
    %cst_21 = arith.constant 1.000000e+00 : f32
    %42 = vector.broadcast %cst_21 : f32 to vector<16x128xf32>
    %43 = arith.addf %42, %41 : vector<16x128xf32>
    %44 = arith.divf %42, %43 : vector<16x128xf32>
    %45 = math.tanh %39 : vector<16x128xf32>
    %46 = vector.extract_strided_slice %44 {offsets = [0, 0], sizes = [16, 32], strides = [1, 1]} : vector<16x128xf32> to vector<16x32xf32>
    %47 = vector.extract_strided_slice %44 {offsets = [0, 32], sizes = [16, 32], strides = [1, 1]} : vector<16x128xf32> to vector<16x32xf32>
    %48 = vector.extract_strided_slice %45 {offsets = [0, 64], sizes = [16, 32], strides = [1, 1]} : vector<16x128xf32> to vector<16x32xf32>
    %49 = vector.extract_strided_slice %44 {offsets = [0, 96], sizes = [16, 32], strides = [1, 1]} : vector<16x128xf32> to vector<16x32xf32>
    %50 = arith.mulf %47, %29 : vector<16x32xf32>
    %51 = arith.mulf %46, %48 : vector<16x32xf32>
    %52 = arith.addf %50, %51 : vector<16x32xf32>
    %53 = math.tanh %52 : vector<16x32xf32>
    %54 = arith.mulf %49, %53 : vector<16x32xf32>
    %55 = arith.index_cast %35 : i32 to index
    %c0_22 = arith.constant 0 : index
    %56 = vector.load %arg15[%55, %c0_22] : memref<128x32xf32, #tpu.memory_space<vmem>>, vector<16x32xf32>
    tpu.vector_store %arg15[%55, %c0_22], %54 {strides = array<i32>} : memref<128x32xf32, #tpu.memory_space<vmem>>, vector<16x32xf32>,
    %c2_i32 = arith.constant 2 : i32
    %c16_i32_23 = arith.constant 16 : i32
    %57 = arith.muli %c2_i32, %c16_i32_23 : i32
    %58 = tpu.assume_multiple %57, 16 : i32
    %59 = arith.index_cast %58 : i32 to index
    %c0_24 = arith.constant 0 : index
    %60 = vector.load %arg14[%59, %c0_24] : memref<128x128xf32, #tpu.memory_space<vmem>>, vector<16x128xf32>
    %cst_25 = arith.constant dense<0.000000e+00> : vector<16x128xf32>
    %61 = tpu.matmul %54, %8, %cst_25 {dimension_numbers = #tpu.dot_dimension_numbers<[1], [0], [0], [1], [0, 0, 1, 1], [], []>} : vector<16x32xf32>, vector<32x128xf32>, vector<16x128xf32> -> vector<16x128xf32>
    %62 = arith.addf %60, %61 : vector<16x128xf32>
    %63 = arith.negf %62 : vector<16x128xf32>
    %64 = math.exp %63 : vector<16x128xf32>
    %cst_26 = arith.constant 1.000000e+00 : f32
    %65 = vector.broadcast %cst_26 : f32 to vector<16x128xf32>
    %66 = arith.addf %65, %64 : vector<16x128xf32>
    %67 = arith.divf %65, %66 : vector<16x128xf32>
    %68 = math.tanh %62 : vector<16x128xf32>
    %69 = vector.extract_strided_slice %67 {offsets = [0, 0], sizes = [16, 32], strides = [1, 1]} : vector<16x128xf32> to vector<16x32xf32>
    %70 = vector.extract_strided_slice %67 {offsets = [0, 32], sizes = [16, 32], strides = [1, 1]} : vector<16x128xf32> to vector<16x32xf32>
    %71 = vector.extract_strided_slice %68 {offsets = [0, 64], sizes = [16, 32], strides = [1, 1]} : vector<16x128xf32> to vector<16x32xf32>
    %72 = vector.extract_strided_slice %67 {offsets = [0, 96], sizes = [16, 32], strides = [1, 1]} : vector<16x128xf32> to vector<16x32xf32>
    %73 = arith.mulf %70, %52 : vector<16x32xf32>
    %74 = arith.mulf %69, %71 : vector<16x32xf32>
    %75 = arith.addf %73, %74 : vector<16x32xf32>
    %76 = math.tanh %75 : vector<16x32xf32>
    %77 = arith.mulf %72, %76 : vector<16x32xf32>
    %78 = arith.index_cast %58 : i32 to index
    %c0_27 = arith.constant 0 : index
    %79 = vector.load %arg15[%78, %c0_27] : memref<128x32xf32, #tpu.memory_space<vmem>>, vector<16x32xf32>
    tpu.vector_store %arg15[%78, %c0_27], %77 {strides = array<i32>} : memref<128x32xf32, #tpu.memory_space<vmem>>, vector<16x32xf32>,
    %c3_i32 = arith.constant 3 : i32
    %c16_i32_28 = arith.constant 16 : i32
    %80 = arith.muli %c3_i32, %c16_i32_28 : i32
    %81 = tpu.assume_multiple %80, 16 : i32
    %82 = arith.index_cast %81 : i32 to index
    %c0_29 = arith.constant 0 : index
    %83 = vector.load %arg14[%82, %c0_29] : memref<128x128xf32, #tpu.memory_space<vmem>>, vector<16x128xf32>
    %cst_30 = arith.constant dense<0.000000e+00> : vector<16x128xf32>
    %84 = tpu.matmul %77, %8, %cst_30 {dimension_numbers = #tpu.dot_dimension_numbers<[1], [0], [0], [1], [0, 0, 1, 1], [], []>} : vector<16x32xf32>, vector<32x128xf32>, vector<16x128xf32> -> vector<16x128xf32>
    %85 = arith.addf %83, %84 : vector<16x128xf32>
    %86 = arith.negf %85 : vector<16x128xf32>
    %87 = math.exp %86 : vector<16x128xf32>
    %cst_31 = arith.constant 1.000000e+00 : f32
    %88 = vector.broadcast %cst_31 : f32 to vector<16x128xf32>
    %89 = arith.addf %88, %87 : vector<16x128xf32>
    %90 = arith.divf %88, %89 : vector<16x128xf32>
    %91 = math.tanh %85 : vector<16x128xf32>
    %92 = vector.extract_strided_slice %90 {offsets = [0, 0], sizes = [16, 32], strides = [1, 1]} : vector<16x128xf32> to vector<16x32xf32>
    %93 = vector.extract_strided_slice %90 {offsets = [0, 32], sizes = [16, 32], strides = [1, 1]} : vector<16x128xf32> to vector<16x32xf32>
    %94 = vector.extract_strided_slice %91 {offsets = [0, 64], sizes = [16, 32], strides = [1, 1]} : vector<16x128xf32> to vector<16x32xf32>
    %95 = vector.extract_strided_slice %90 {offsets = [0, 96], sizes = [16, 32], strides = [1, 1]} : vector<16x128xf32> to vector<16x32xf32>
    %96 = arith.mulf %93, %75 : vector<16x32xf32>
    %97 = arith.mulf %92, %94 : vector<16x32xf32>
    %98 = arith.addf %96, %97 : vector<16x32xf32>
    %99 = math.tanh %98 : vector<16x32xf32>
    %100 = arith.mulf %95, %99 : vector<16x32xf32>
    %101 = arith.index_cast %81 : i32 to index
    %c0_32 = arith.constant 0 : index
    %102 = vector.load %arg15[%101, %c0_32] : memref<128x32xf32, #tpu.memory_space<vmem>>, vector<16x32xf32>
    tpu.vector_store %arg15[%101, %c0_32], %100 {strides = array<i32>} : memref<128x32xf32, #tpu.memory_space<vmem>>, vector<16x32xf32>,
    %c4_i32 = arith.constant 4 : i32
    %c16_i32_33 = arith.constant 16 : i32
    %103 = arith.muli %c4_i32, %c16_i32_33 : i32
    %104 = tpu.assume_multiple %103, 16 : i32
    %105 = arith.index_cast %104 : i32 to index
    %c0_34 = arith.constant 0 : index
    %106 = vector.load %arg14[%105, %c0_34] : memref<128x128xf32, #tpu.memory_space<vmem>>, vector<16x128xf32>
    %cst_35 = arith.constant dense<0.000000e+00> : vector<16x128xf32>
    %107 = tpu.matmul %100, %8, %cst_35 {dimension_numbers = #tpu.dot_dimension_numbers<[1], [0], [0], [1], [0, 0, 1, 1], [], []>} : vector<16x32xf32>, vector<32x128xf32>, vector<16x128xf32> -> vector<16x128xf32>
    %108 = arith.addf %106, %107 : vector<16x128xf32>
    %109 = arith.negf %108 : vector<16x128xf32>
    %110 = math.exp %109 : vector<16x128xf32>
    %cst_36 = arith.constant 1.000000e+00 : f32
    %111 = vector.broadcast %cst_36 : f32 to vector<16x128xf32>
    %112 = arith.addf %111, %110 : vector<16x128xf32>
    %113 = arith.divf %111, %112 : vector<16x128xf32>
    %114 = math.tanh %108 : vector<16x128xf32>
    %115 = vector.extract_strided_slice %113 {offsets = [0, 0], sizes = [16, 32], strides = [1, 1]} : vector<16x128xf32> to vector<16x32xf32>
    %116 = vector.extract_strided_slice %113 {offsets = [0, 32], sizes = [16, 32], strides = [1, 1]} : vector<16x128xf32> to vector<16x32xf32>
    %117 = vector.extract_strided_slice %114 {offsets = [0, 64], sizes = [16, 32], strides = [1, 1]} : vector<16x128xf32> to vector<16x32xf32>
    %118 = vector.extract_strided_slice %113 {offsets = [0, 96], sizes = [16, 32], strides = [1, 1]} : vector<16x128xf32> to vector<16x32xf32>
    %119 = arith.mulf %116, %98 : vector<16x32xf32>
    %120 = arith.mulf %115, %117 : vector<16x32xf32>
    %121 = arith.addf %119, %120 : vector<16x32xf32>
    %122 = math.tanh %121 : vector<16x32xf32>
    %123 = arith.mulf %118, %122 : vector<16x32xf32>
    %124 = arith.index_cast %104 : i32 to index
    %c0_37 = arith.constant 0 : index
    %125 = vector.load %arg15[%124, %c0_37] : memref<128x32xf32, #tpu.memory_space<vmem>>, vector<16x32xf32>
    tpu.vector_store %arg15[%124, %c0_37], %123 {strides = array<i32>} : memref<128x32xf32, #tpu.memory_space<vmem>>, vector<16x32xf32>,
    %c5_i32 = arith.constant 5 : i32
    %c16_i32_38 = arith.constant 16 : i32
    %126 = arith.muli %c5_i32, %c16_i32_38 : i32
    %127 = tpu.assume_multiple %126, 16 : i32
    %128 = arith.index_cast %127 : i32 to index
    %c0_39 = arith.constant 0 : index
    %129 = vector.load %arg14[%128, %c0_39] : memref<128x128xf32, #tpu.memory_space<vmem>>, vector<16x128xf32>
    %cst_40 = arith.constant dense<0.000000e+00> : vector<16x128xf32>
    %130 = tpu.matmul %123, %8, %cst_40 {dimension_numbers = #tpu.dot_dimension_numbers<[1], [0], [0], [1], [0, 0, 1, 1], [], []>} : vector<16x32xf32>, vector<32x128xf32>, vector<16x128xf32> -> vector<16x128xf32>
    %131 = arith.addf %129, %130 : vector<16x128xf32>
    %132 = arith.negf %131 : vector<16x128xf32>
    %133 = math.exp %132 : vector<16x128xf32>
    %cst_41 = arith.constant 1.000000e+00 : f32
    %134 = vector.broadcast %cst_41 : f32 to vector<16x128xf32>
    %135 = arith.addf %134, %133 : vector<16x128xf32>
    %136 = arith.divf %134, %135 : vector<16x128xf32>
    %137 = math.tanh %131 : vector<16x128xf32>
    %138 = vector.extract_strided_slice %136 {offsets = [0, 0], sizes = [16, 32], strides = [1, 1]} : vector<16x128xf32> to vector<16x32xf32>
    %139 = vector.extract_strided_slice %136 {offsets = [0, 32], sizes = [16, 32], strides = [1, 1]} : vector<16x128xf32> to vector<16x32xf32>
    %140 = vector.extract_strided_slice %137 {offsets = [0, 64], sizes = [16, 32], strides = [1, 1]} : vector<16x128xf32> to vector<16x32xf32>
    %141 = vector.extract_strided_slice %136 {offsets = [0, 96], sizes = [16, 32], strides = [1, 1]} : vector<16x128xf32> to vector<16x32xf32>
    %142 = arith.mulf %139, %121 : vector<16x32xf32>
    %143 = arith.mulf %138, %140 : vector<16x32xf32>
    %144 = arith.addf %142, %143 : vector<16x32xf32>
    %145 = math.tanh %144 : vector<16x32xf32>
    %146 = arith.mulf %141, %145 : vector<16x32xf32>
    %147 = arith.index_cast %127 : i32 to index
    %c0_42 = arith.constant 0 : index
    %148 = vector.load %arg15[%147, %c0_42] : memref<128x32xf32, #tpu.memory_space<vmem>>, vector<16x32xf32>
    tpu.vector_store %arg15[%147, %c0_42], %146 {strides = array<i32>} : memref<128x32xf32, #tpu.memory_space<vmem>>, vector<16x32xf32>,
    %c6_i32 = arith.constant 6 : i32
    %c16_i32_43 = arith.constant 16 : i32
    %149 = arith.muli %c6_i32, %c16_i32_43 : i32
    %150 = tpu.assume_multiple %149, 16 : i32
    %151 = arith.index_cast %150 : i32 to index
    %c0_44 = arith.constant 0 : index
    %152 = vector.load %arg14[%151, %c0_44] : memref<128x128xf32, #tpu.memory_space<vmem>>, vector<16x128xf32>
    %cst_45 = arith.constant dense<0.000000e+00> : vector<16x128xf32>
    %153 = tpu.matmul %146, %8, %cst_45 {dimension_numbers = #tpu.dot_dimension_numbers<[1], [0], [0], [1], [0, 0, 1, 1], [], []>} : vector<16x32xf32>, vector<32x128xf32>, vector<16x128xf32> -> vector<16x128xf32>
    %154 = arith.addf %152, %153 : vector<16x128xf32>
    %155 = arith.negf %154 : vector<16x128xf32>
    %156 = math.exp %155 : vector<16x128xf32>
    %cst_46 = arith.constant 1.000000e+00 : f32
    %157 = vector.broadcast %cst_46 : f32 to vector<16x128xf32>
    %158 = arith.addf %157, %156 : vector<16x128xf32>
    %159 = arith.divf %157, %158 : vector<16x128xf32>
    %160 = math.tanh %154 : vector<16x128xf32>
    %161 = vector.extract_strided_slice %159 {offsets = [0, 0], sizes = [16, 32], strides = [1, 1]} : vector<16x128xf32> to vector<16x32xf32>
    %162 = vector.extract_strided_slice %159 {offsets = [0, 32], sizes = [16, 32], strides = [1, 1]} : vector<16x128xf32> to vector<16x32xf32>
    %163 = vector.extract_strided_slice %160 {offsets = [0, 64], sizes = [16, 32], strides = [1, 1]} : vector<16x128xf32> to vector<16x32xf32>
    %164 = vector.extract_strided_slice %159 {offsets = [0, 96], sizes = [16, 32], strides = [1, 1]} : vector<16x128xf32> to vector<16x32xf32>
    %165 = arith.mulf %162, %144 : vector<16x32xf32>
    %166 = arith.mulf %161, %163 : vector<16x32xf32>
    %167 = arith.addf %165, %166 : vector<16x32xf32>
    %168 = math.tanh %167 : vector<16x32xf32>
    %169 = arith.mulf %164, %168 : vector<16x32xf32>
    %170 = arith.index_cast %150 : i32 to index
    %c0_47 = arith.constant 0 : index
    %171 = vector.load %arg15[%170, %c0_47] : memref<128x32xf32, #tpu.memory_space<vmem>>, vector<16x32xf32>
    tpu.vector_store %arg15[%170, %c0_47], %169 {strides = array<i32>} : memref<128x32xf32, #tpu.memory_space<vmem>>, vector<16x32xf32>,
    %c7_i32 = arith.constant 7 : i32
    %c16_i32_48 = arith.constant 16 : i32
    %172 = arith.muli %c7_i32, %c16_i32_48 : i32
    %173 = tpu.assume_multiple %172, 16 : i32
    %174 = arith.index_cast %173 : i32 to index
    %c0_49 = arith.constant 0 : index
    %175 = vector.load %arg14[%174, %c0_49] : memref<128x128xf32, #tpu.memory_space<vmem>>, vector<16x128xf32>
    %cst_50 = arith.constant dense<0.000000e+00> : vector<16x128xf32>
    %176 = tpu.matmul %169, %8, %cst_50 {dimension_numbers = #tpu.dot_dimension_numbers<[1], [0], [0], [1], [0, 0, 1, 1], [], []>} : vector<16x32xf32>, vector<32x128xf32>, vector<16x128xf32> -> vector<16x128xf32>
    %177 = arith.addf %175, %176 : vector<16x128xf32>
    %178 = arith.negf %177 : vector<16x128xf32>
    %179 = math.exp %178 : vector<16x128xf32>
    %cst_51 = arith.constant 1.000000e+00 : f32
    %180 = vector.broadcast %cst_51 : f32 to vector<16x128xf32>
    %181 = arith.addf %180, %179 : vector<16x128xf32>
    %182 = arith.divf %180, %181 : vector<16x128xf32>
    %183 = math.tanh %177 : vector<16x128xf32>
    %184 = vector.extract_strided_slice %182 {offsets = [0, 0], sizes = [16, 32], strides = [1, 1]} : vector<16x128xf32> to vector<16x32xf32>
    %185 = vector.extract_strided_slice %182 {offsets = [0, 32], sizes = [16, 32], strides = [1, 1]} : vector<16x128xf32> to vector<16x32xf32>
    %186 = vector.extract_strided_slice %183 {offsets = [0, 64], sizes = [16, 32], strides = [1, 1]} : vector<16x128xf32> to vector<16x32xf32>
    %187 = vector.extract_strided_slice %182 {offsets = [0, 96], sizes = [16, 32], strides = [1, 1]} : vector<16x128xf32> to vector<16x32xf32>
    %188 = arith.mulf %185, %167 : vector<16x32xf32>
    %189 = arith.mulf %184, %186 : vector<16x32xf32>
    %190 = arith.addf %188, %189 : vector<16x32xf32>
    %191 = math.tanh %190 : vector<16x32xf32>
    %192 = arith.mulf %187, %191 : vector<16x32xf32>
    %193 = arith.index_cast %173 : i32 to index
    %c0_52 = arith.constant 0 : index
    %194 = vector.load %arg15[%193, %c0_52] : memref<128x32xf32, #tpu.memory_space<vmem>>, vector<16x32xf32>
    tpu.vector_store %arg15[%193, %c0_52], %192 {strides = array<i32>} : memref<128x32xf32, #tpu.memory_space<vmem>>, vector<16x32xf32>,
    %c8_i32 = arith.constant 8 : i32
    %c0_53 = arith.constant 0 : index
    %c0_54 = arith.constant 0 : index
    %195 = vector.load %arg12[%c0_53, %c0_54] : memref<16x32xf32, #tpu.memory_space<vmem>>, vector<16x32xf32>
    tpu.vector_store %arg12[%c0_53, %c0_54], %192 {strides = array<i32>} : memref<16x32xf32, #tpu.memory_space<vmem>>, vector<16x32xf32>,
    %c0_55 = arith.constant 0 : index
    %c0_56 = arith.constant 0 : index
    %196 = vector.load %arg13[%c0_55, %c0_56] : memref<16x32xf32, #tpu.memory_space<vmem>>, vector<16x32xf32>
    tpu.vector_store %arg13[%c0_55, %c0_56], %190 {strides = array<i32>} : memref<16x32xf32, #tpu.memory_space<vmem>>, vector<16x32xf32>,
    %c0_57 = arith.constant 0 : index
    %c0_58 = arith.constant 0 : index
    %197 = vector.load %arg15[%c0_57, %c0_58] : memref<128x32xf32, #tpu.memory_space<vmem>>, vector<128x32xf32>
    %c0_59 = arith.constant 0 : index
    %c0_60 = arith.constant 0 : index
    %198 = vector.load %arg7[%c0_59, %c0_60] : memref<32x16xf32, #tpu.memory_space<vmem>>, vector<32x16xf32>
    %cst_61 = arith.constant dense<0.000000e+00> : vector<128x16xf32>
    %199 = tpu.matmul %197, %198, %cst_61 {dimension_numbers = #tpu.dot_dimension_numbers<[1], [0], [0], [1], [0, 0, 1, 1], [], []>} : vector<128x32xf32>, vector<32x16xf32>, vector<128x16xf32> -> vector<128x16xf32>
    %c0_62 = arith.constant 0 : index
    %c0_63 = arith.constant 0 : index
    %200 = vector.load %arg8[%c0_62, %c0_63] : memref<1x16xf32, #tpu.memory_space<vmem>>, vector<1x16xf32>
    %201 = vector.broadcast %200 : vector<1x16xf32> to vector<128x16xf32>
    %202 = arith.addf %199, %201 : vector<128x16xf32>
    %cst_64 = arith.constant dense<0.000000e+00> : vector<128xf32>
    %203 = vector.multi_reduction <add>, %202, %cst_64 [1] : vector<128x16xf32> to vector<128xf32>
    %204 = vector.shape_cast %203 : vector<128xf32> to vector<128x1xf32>
    %cst_65 = arith.constant 1.600000e+01 : f32
    %205 = vector.broadcast %cst_65 : f32 to vector<128x1xf32>
    %206 = arith.divf %204, %205 : vector<128x1xf32>
    %207 = vector.broadcast %206 : vector<128x1xf32> to vector<128x16xf32>
    %208 = arith.subf %202, %207 : vector<128x16xf32>
    %209 = arith.mulf %208, %208 : vector<128x16xf32>
    %cst_66 = arith.constant dense<0.000000e+00> : vector<128xf32>
    %210 = vector.multi_reduction <add>, %209, %cst_66 [1] : vector<128x16xf32> to vector<128xf32>
    %211 = vector.shape_cast %210 : vector<128xf32> to vector<128x1xf32>
    %cst_67 = arith.constant 1.600000e+01 : f32
    %212 = vector.broadcast %cst_67 : f32 to vector<128x1xf32>
    %213 = arith.divf %211, %212 : vector<128x1xf32>
    %c0_68 = arith.constant 0 : index
    %c0_69 = arith.constant 0 : index
    %214 = vector.load %arg9[%c0_68, %c0_69] : memref<1x16xf32, #tpu.memory_space<vmem>>, vector<1x16xf32>
    %215 = vector.broadcast %214 : vector<1x16xf32> to vector<128x16xf32>
    %216 = arith.mulf %215, %208 : vector<128x16xf32>
    %cst_70 = arith.constant 9.99999993E-9 : f32
    %217 = vector.broadcast %cst_70 : f32 to vector<128x1xf32>
    %218 = arith.addf %213, %217 : vector<128x1xf32>
    %219 = math.rsqrt %218 : vector<128x1xf32>
    %220 = vector.broadcast %219 : vector<128x1xf32> to vector<128x16xf32>
    %221 = arith.mulf %216, %220 : vector<128x16xf32>
    %c0_71 = arith.constant 0 : index
    %c0_72 = arith.constant 0 : index
    %222 = vector.load %arg10[%c0_71, %c0_72] : memref<1x16xf32, #tpu.memory_space<vmem>>, vector<1x16xf32>
    %223 = vector.broadcast %222 : vector<1x16xf32> to vector<128x16xf32>
    %224 = arith.addf %221, %223 : vector<128x16xf32>
    %c0_73 = arith.constant 0 : index
    %c0_74 = arith.constant 0 : index
    %c0_75 = arith.constant 0 : index
    %225 = vector.load %arg1[%c0_73, %c0_74, %c0_75] : memref<8x16x16xf32, #tpu.memory_space<vmem>>, vector<8x16x16xf32>
    %226 = vector.shape_cast %224 : vector<128x16xf32> to vector<8x16x16xf32>
    %227 = arith.addf %225, %226 : vector<8x16x16xf32>
    %c0_76 = arith.constant 0 : index
    %c0_77 = arith.constant 0 : index
    %c0_78 = arith.constant 0 : index
    %228 = vector.load %arg11[%c0_76, %c0_77, %c0_78] : memref<8x16x16xf32, #tpu.memory_space<vmem>>, vector<8x16x16xf32>
    tpu.vector_store %arg11[%c0_76, %c0_77, %c0_78], %227 {strides = array<i32>} : memref<8x16x16xf32, #tpu.memory_space<vmem>>, vector<8x16x16xf32>,
    return
  }
  func.func @transform_0(%arg0: i32) -> (i32, i32, i32) {
    %c0_i32 = arith.constant 0 : i32
    %c0_i32_0 = arith.constant 0 : i32
    %c0_i32_1 = arith.constant 0 : i32
    return %c0_i32, %arg0, %c0_i32_0 : i32, i32, i32
  }
  func.func @transform_1(%arg0: i32) -> (i32, i32) {
    %c0_i32 = arith.constant 0 : i32
    %c0_i32_0 = arith.constant 0 : i32
    %c0_i32_1 = arith.constant 0 : i32
    return %c0_i32, %c0_i32_0 : i32, i32
  }
  func.func @transform_2(%arg0: i32) -> (i32, i32) {
    %c0_i32 = arith.constant 0 : i32
    %c0_i32_0 = arith.constant 0 : i32
    %c0_i32_1 = arith.constant 0 : i32
    return %c0_i32, %c0_i32_0 : i32, i32
  }
  func.func @transform_3(%arg0: i32) -> (i32, i32) {
    %c0_i32 = arith.constant 0 : i32
    %c0_i32_0 = arith.constant 0 : i32
    %c0_i32_1 = arith.constant 0 : i32
    return %c0_i32, %c0_i32_0 : i32, i32
  }
  func.func @transform_4(%arg0: i32) -> (i32, i32) {
    %c0_i32 = arith.constant 0 : i32
    %c0_i32_0 = arith.constant 0 : i32
    return %arg0, %c0_i32 : i32, i32
  }
  func.func @transform_5(%arg0: i32) -> (i32, i32) {
    %c0_i32 = arith.constant 0 : i32
    %c0_i32_0 = arith.constant 0 : i32
    return %arg0, %c0_i32 : i32, i32
  }
  func.func @transform_6(%arg0: i32) -> (i32, i32) {
    %c0_i32 = arith.constant 0 : i32
    %c0_i32_0 = arith.constant 0 : i32
    %c0_i32_1 = arith.constant 0 : i32
    return %c0_i32, %c0_i32_0 : i32, i32
  }
  func.func @transform_7(%arg0: i32) -> (i32, i32) {
    %c0_i32 = arith.constant 0 : i32
    %c0_i32_0 = arith.constant 0 : i32
    %c0_i32_1 = arith.constant 0 : i32
    return %c0_i32, %c0_i32_0 : i32, i32
  }
  func.func @transform_8(%arg0: i32) -> (i32, i32) {
    %c0_i32 = arith.constant 0 : i32
    %c0_i32_0 = arith.constant 0 : i32
    %c0_i32_1 = arith.constant 0 : i32
    return %c0_i32, %c0_i32_0 : i32, i32
  }
  func.func @transform_9(%arg0: i32) -> (i32, i32) {
    %c0_i32 = arith.constant 0 : i32
    %c0_i32_0 = arith.constant 0 : i32
    %c0_i32_1 = arith.constant 0 : i32
    return %c0_i32, %c0_i32_0 : i32, i32
  }
  func.func @transform_10(%arg0: i32) -> (i32, i32, i32) {
    %c0_i32 = arith.constant 0 : i32
    %c0_i32_0 = arith.constant 0 : i32
    %c0_i32_1 = arith.constant 0 : i32
    return %c0_i32, %arg0, %c0_i32_0 : i32, i32, i32
  }
  func.func @transform_11(%arg0: i32) -> (i32, i32) {
    %c0_i32 = arith.constant 0 : i32
    %c0_i32_0 = arith.constant 0 : i32
    return %arg0, %c0_i32 : i32, i32
  }
  func.func @transform_12(%arg0: i32) -> (i32, i32) {
    %c0_i32 = arith.constant 0 : i32
    %c0_i32_0 = arith.constant 0 : i32
    return %arg0, %c0_i32 : i32, i32
  }
}

</mosaic_0001>

<llo_original>
// kernel: tpu_custom_call.1
$region0: #{tpu_custom_call.1}
  #allocation0 [shape = 'u32[]', space=smem, size = 0x4, offset = 0x4, fixed_abs, tag = 'smem constant byte address 0x4 - core index']
  #allocation1 [shape = 'u32[144,128]{1,0:T(1,128)}', space=vmem, size = 0x12000, scoped, tag = 'internal scratch']
  #allocation2 [shape = 'f32[128,128]{1,0:T(8,128)}', space=vmem, size = 0x10000, scoped, tag = 'scratch operand']
  #allocation3 [shape = 'f32[128,32]{1,0:T(8,128)}', space=vmem, size = 0x10000, scoped, tag = 'scratch operand']
  %s0 = inlined_call_operand.hbm [shape: f32[8,16,16], index: 0, kind: input, shape index: {}]
  %s1 = inlined_call_operand.vmem [shape: f32[16,128], index: 1, kind: input, shape index: {}]
  %s2 = inlined_call_operand.vmem [shape: f32[32,128], index: 2, kind: input, shape index: {}]
  %s3 = inlined_call_operand.vmem [shape: f32[1,128], index: 3, kind: input, shape index: {}]
  %s4 = inlined_call_operand.hbm [shape: f32[16,32], index: 4, kind: input, shape index: {}]
  %s5 = inlined_call_operand.hbm [shape: f32[16,32], index: 5, kind: input, shape index: {}]
  %s6 = inlined_call_operand.vmem [shape: f32[32,16], index: 6, kind: input, shape index: {}]
  %s7 = inlined_call_operand.vmem [shape: f32[1,16], index: 7, kind: input, shape index: {}]
  %s8 = inlined_call_operand.vmem [shape: f32[1,16], index: 8, kind: input, shape index: {}]
  %s9 = inlined_call_operand.vmem [shape: f32[1,16], index: 9, kind: input, shape index: {}]
  %s10 = inlined_call_operand.hbm [shape: f32[8,16,16], index: 10, kind: output, shape index: {0}]
  %s11 = inlined_call_operand.hbm [shape: f32[16,32], index: 11, kind: output, shape index: {1}]
  %s12 = inlined_call_operand.hbm [shape: f32[16,32], index: 12, kind: output, shape index: {2}]
  %13 = xla_tuple %s10, %s11, %s12
  %s14 = sld [smem:[#allocation0]]
  $region78: #{tpu_custom_call.1} parent=0
    _
  %s16 = ssub.s32 1, %s14
  %s17 = scalar_select 0, %s16, %s14
  $region1: #{tpu_custom_call.1} parent=0
    #allocation4 [shape = 'u8[65536]{0}', space=vmem, size = 0x10000, scoped, tag = 'input window, operand 0, single buffered']
    #allocation5 [shape = 's32[1]{0}', space=sflag, size = 0x4, scoped, tag = 'scoped memory for tpu_custom_call.1']
    #allocation6 [shape = 's32[1]{0}', space=sflag, size = 0x4, scoped, tag = 'scoped memory for tpu_custom_call.1']
    #allocation7 [shape = 'u8[8192]{0}', space=vmem, size = 0x2000, scoped, tag = 'input window, operand 4, single buffered']
    #allocation8 [shape = 's32[1]{0}', space=sflag, size = 0x4, scoped, tag = 'scoped memory for tpu_custom_call.1']
    #allocation9 [shape = 'u8[8192]{0}', space=vmem, size = 0x2000, scoped, tag = 'input window, operand 5, single buffered']
    #allocation10 [shape = 'u8[65536]{0}', space=vmem, size = 0x10000, scoped, tag = 'output window, operand 0, single buffered']
    #allocation11 [shape = 'u8[8192]{0}', space=vmem, size = 0x2000, scoped, tag = 'output window, operand 1, single buffered']
    #allocation12 [shape = 's32[1]{0}', space=sflag, size = 0x4, scoped, tag = 'scoped memory for tpu_custom_call.1']
    #allocation13 [shape = 'u8[8192]{0}', space=vmem, size = 0x2000, scoped, tag = 'output window, operand 2, single buffered']
    %18 = vsyncpa [#allocation5], 0
    %19 = vsyncpa [#allocation8], 0
    %20 = vsyncpa [#allocation6], 0
    %21 = vsyncpa [#allocation12], 0
    // Predicated region
    $region2: #{tpu_custom_call.1} parent=1 // pred_check
      _
    $region3: #{tpu_custom_call.1} parent=1 // pred_check_branch
      %23 = sbr.rel (0) target = $region5
    $region4: #{tpu_custom_call.1} parent=1 // pred_region
      %s25 = ssub.s32 2048, 2048
      %26 = vsyncadd [#allocation5], %s25
      %s27 = sshll.u32 [#allocation4], 4
      %s28 = int_to_ptr.vmem [resolvable:$true] %s27
      %33 = dma.hbm_to_vmem [thread:$0]  %s0, 2048, %s28, [#allocation5], 128, 128, 8
    $region5: #{tpu_custom_call.1} parent=1 // pred_fallthru
      _
    // Predicated region
    $region6: #{tpu_custom_call.1} parent=1 // pred_check
      _
    $region7: #{tpu_custom_call.1} parent=1 // pred_check_branch
      %35 = sbr.rel (0) target = $region9
    $region8: #{tpu_custom_call.1} parent=1 // pred_region
      _
    $region9: #{tpu_custom_call.1} parent=1 // pred_fallthru
      _
    // Predicated region
    $region10: #{tpu_custom_call.1} parent=1 // pred_check
      _
    $region11: #{tpu_custom_call.1} parent=1 // pred_check_branch
      %37 = sbr.rel (0) target = $region13
    $region12: #{tpu_custom_call.1} parent=1 // pred_region
      _
    $region13: #{tpu_custom_call.1} parent=1 // pred_fallthru
      _
    // Predicated region
    $region14: #{tpu_custom_call.1} parent=1 // pred_check
      _
    $region15: #{tpu_custom_call.1} parent=1 // pred_check_branch
      %39 = sbr.rel (0) target = $region17
    $region16: #{tpu_custom_call.1} parent=1 // pred_region
      _
    $region17: #{tpu_custom_call.1} parent=1 // pred_fallthru
      _
    // Predicated region
    $region18: #{tpu_custom_call.1} parent=1 // pred_check
      _
    $region19: #{tpu_custom_call.1} parent=1 // pred_check_branch
      %41 = sbr.rel (0) target = $region21
    $region20: #{tpu_custom_call.1} parent=1 // pred_region
      %s43 = ssub.s32 256, 256
      %44 = vsyncadd [#allocation8], %s43
      %s45 = sshll.u32 [#allocation7], 4
      %s46 = int_to_ptr.vmem [resolvable:$true] %s45
      %51 = dma.hbm_to_vmem [thread:$0]  %s4, 256, %s46, [#allocation8], 128, 128, 8
    $region21: #{tpu_custom_call.1} parent=1 // pred_fallthru
      _
    // Predicated region
    $region22: #{tpu_custom_call.1} parent=1 // pred_check
      _
    $region23: #{tpu_custom_call.1} parent=1 // pred_check_branch
      %53 = sbr.rel (0) target = $region25
    $region24: #{tpu_custom_call.1} parent=1 // pred_region
      %s55 = ssub.s32 256, 256
      %56 = vsyncadd [#allocation8], %s55
      %s57 = sshll.u32 [#allocation9], 4
      %s58 = int_to_ptr.vmem [resolvable:$true] %s57
      %63 = dma.hbm_to_vmem [thread:$0]  %s5, 256, %s58, [#allocation8], 128, 128, 8
    $region25: #{tpu_custom_call.1} parent=1 // pred_fallthru
      _
    // Predicated region
    $region26: #{tpu_custom_call.1} parent=1 // pred_check
      _
    $region27: #{tpu_custom_call.1} parent=1 // pred_check_branch
      %65 = sbr.rel (0) target = $region29
    $region28: #{tpu_custom_call.1} parent=1 // pred_region
      _
    $region29: #{tpu_custom_call.1} parent=1 // pred_fallthru
      _
    // Predicated region
    $region30: #{tpu_custom_call.1} parent=1 // pred_check
      _
    $region31: #{tpu_custom_call.1} parent=1 // pred_check_branch
      %67 = sbr.rel (0) target = $region33
    $region32: #{tpu_custom_call.1} parent=1 // pred_region
      _
    $region33: #{tpu_custom_call.1} parent=1 // pred_fallthru
      _
    // Predicated region
    $region34: #{tpu_custom_call.1} parent=1 // pred_check
      _
    $region35: #{tpu_custom_call.1} parent=1 // pred_check_branch
      %69 = sbr.rel (0) target = $region37
    $region36: #{tpu_custom_call.1} parent=1 // pred_region
      _
    $region37: #{tpu_custom_call.1} parent=1 // pred_fallthru
      _
    // Predicated region
    $region38: #{tpu_custom_call.1} parent=1 // pred_check
      _
    $region39: #{tpu_custom_call.1} parent=1 // pred_check_branch
      %71 = sbr.rel (0) target = $region41
    $region40: #{tpu_custom_call.1} parent=1 // pred_region
      _
    $region41: #{tpu_custom_call.1} parent=1 // pred_fallthru
      _
    // Predicated region
    $region42: #{tpu_custom_call.1} parent=1 // pred_check
      _
    $region43: #{tpu_custom_call.1} parent=1 // pred_check_branch
      %73 = sbr.rel (0) target = $region45
    $region44: #{tpu_custom_call.1} parent=1 // pred_region
      %74 = dma.done [#allocation5], 2048
    $region45: #{tpu_custom_call.1} parent=1 // pred_fallthru
      _
    // Predicated region
    $region46: #{tpu_custom_call.1} parent=1 // pred_check
      _
    $region47: #{tpu_custom_call.1} parent=1 // pred_check_branch
      %76 = sbr.rel (0) target = $region49
    $region48: #{tpu_custom_call.1} parent=1 // pred_region
      %77 = dma.done [#allocation8], 256
    $region49: #{tpu_custom_call.1} parent=1 // pred_fallthru
      _
    // Predicated region
    $region50: #{tpu_custom_call.1} parent=1 // pred_check
      _
    $region51: #{tpu_custom_call.1} parent=1 // pred_check_branch
      %79 = sbr.rel (0) target = $region53
    $region52: #{tpu_custom_call.1} parent=1 // pred_region
      %80 = dma.done [#allocation8], 256
    $region53: #{tpu_custom_call.1} parent=1 // pred_fallthru
      _
    %v81 = vld [vmem:[#allocation4] sm:$0xff]
    %v82 = vld [vmem:[#allocation4 + $0x8] sm:$0xff]
    %v83 = vld [vmem:[#allocation4 + $0x10] sm:$0xff]
    %v84 = vld [vmem:[#allocation4 + $0x18] sm:$0xff]
    %v85 = vld [vmem:[#allocation4 + $0x20] sm:$0xff]
    %v86 = vld [vmem:[#allocation4 + $0x28] sm:$0xff]
    %v87 = vld [vmem:[#allocation4 + $0x30] sm:$0xff]
    %v88 = vld [vmem:[#allocation4 + $0x38] sm:$0xff]
    %v89 = vld [vmem:[#allocation4 + $0x40] sm:$0xff]
    %v90 = vld [vmem:[#allocation4 + $0x48] sm:$0xff]
    %v91 = vld [vmem:[#allocation4 + $0x50] sm:$0xff]
    %v92 = vld [vmem:[#allocation4 + $0x58] sm:$0xff]
    %v93 = vld [vmem:[#allocation4 + $0x60] sm:$0xff]
    %v94 = vld [vmem:[#allocation4 + $0x68] sm:$0xff]
    %v95 = vld [vmem:[#allocation4 + $0x70] sm:$0xff]
    %v96 = vld [vmem:[#allocation4 + $0x78] sm:$0xff]
    %v97 = vld [vmem:[%s1] sm:$0xff]
    %v98 = vld [vmem:[%s1 + $0x8] sm:$0xff]
    %v99 = vld [vmem:[%s3] sm:$0x1]
    %v101 = vlaneseq
    %v102 = vshrl.u32 %v101, 7
    %v103 = vsub.s32 0, %v102
    %v104 = vrot.slane %v99, %v103
    %vm106 = vcmask 130048
    %v108 = vsel %vm106, %v81, 0
    %v111 = vsel %vm106, %v82, 0
    %v114 = vsel %vm106, %v83, 0
    %v117 = vsel %vm106, %v84, 0
    %v120 = vsel %vm106, %v85, 0
    %v123 = vsel %vm106, %v86, 0
    %v126 = vsel %vm106, %v87, 0
    %v129 = vsel %vm106, %v88, 0
    %v132 = vsel %vm106, %v89, 0
    %v135 = vsel %vm106, %v90, 0
    %v138 = vsel %vm106, %v91, 0
    %v141 = vsel %vm106, %v92, 0
    %v144 = vsel %vm106, %v93, 0
    %v147 = vsel %vm106, %v94, 0
    %v150 = vsel %vm106, %v95, 0
    %v153 = vsel %vm106, %v96, 0
    %155 = vmatprep.subr.mxu0 0.0
    %156 = vmatpush1.msra.mxu0 0.0
    %157 = vmatprep.subr.mxu0 0.0
    %158 = vmatpush1.msra.mxu0 0.0
    %159 = vmatprep.subr.mxu0 0.0
    %160 = vmatpush1.msra.mxu0 0.0
    %161 = vmatprep.subr.mxu0 0.0
    %162 = vmatpush1.msra.mxu0 0.0
    %163 = vmatprep.subr.mxu0 0.0
    %164 = vmatpush1.msra.mxu0 0.0
    %165 = vmatprep.subr.mxu0 0.0
    %166 = vmatpush1.msra.mxu0 0.0
    %167 = vmatprep.subr.mxu0 0.0
    %168 = vmatpush1.msra.mxu0 0.0
    %169 = vmatprep.subr.mxu0 0.0
    %170 = vmatpush1.msra.mxu0 0.0
    %171 = vmatprep.subr.mxu0 0.0
    %172 = vmatpush1.msra.mxu0 0.0
    %173 = vmatprep.subr.mxu0 0.0
    %174 = vmatpush1.msra.mxu0 0.0
    %175 = vmatprep.subr.mxu0 0.0
    %176 = vmatpush1.msra.mxu0 0.0
    %177 = vmatprep.subr.mxu0 0.0
    %178 = vmatpush1.msra.mxu0 0.0
    %179 = vmatprep.subr.mxu0 0.0
    %180 = vmatpush1.msra.mxu0 0.0
    %181 = vmatprep.subr.mxu0 0.0
    %182 = vmatpush1.msra.mxu0 0.0
    %183 = vmatprep.subr.mxu0 0.0
    %184 = vmatpush1.msra.mxu0 %v98
    %185 = vmatprep.subr.mxu0 0.0
    %186 = vmatpush1.msra.mxu0 %v97
    %187 = vmatprep.subr.mxu0 0.0
    %188 = vmatpush2.msra.mxu0 0.0
    %189 = vmatprep.subr.mxu0 0.0
    %190 = vmatpush2.msra.mxu0 0.0
    %191 = vmatprep.subr.mxu0 0.0
    %192 = vmatpush2.msra.mxu0 0.0
    %193 = vmatprep.subr.mxu0 0.0
    %194 = vmatpush2.msra.mxu0 0.0
    %195 = vmatprep.subr.mxu0 0.0
    %196 = vmatpush2.msra.mxu0 0.0
    %197 = vmatprep.subr.mxu0 0.0
    %198 = vmatpush2.msra.mxu0 0.0
    %199 = vmatprep.subr.mxu0 0.0
    %200 = vmatpush2.msra.mxu0 0.0
    %201 = vmatprep.subr.mxu0 0.0
    %202 = vmatpush2.msra.mxu0 0.0
    %203 = vmatprep.subr.mxu0 0.0
    %204 = vmatpush2.msra.mxu0 0.0
    %205 = vmatprep.subr.mxu0 0.0
    %206 = vmatpush2.msra.mxu0 0.0
    %207 = vmatprep.subr.mxu0 0.0
    %208 = vmatpush2.msra.mxu0 0.0
    %209 = vmatprep.subr.mxu0 0.0
    %210 = vmatpush2.msra.mxu0 0.0
    %211 = vmatprep.subr.mxu0 0.0
    %212 = vmatpush2.msra.mxu0 0.0
    %213 = vmatprep.subr.mxu0 0.0
    %214 = vmatpush2.msra.mxu0 0.0
    %215 = vmatprep.subr.mxu0 0.0
    %216 = vmatpush2.msra.mxu0 0.0
    %217 = vmatprep.subr.mxu0 0.0
    %218 = vmatpush2.msra.mxu0 0.0
    %219 = vmatprep.mubr.f32.mxu0 0.0
    %220 = vmatmul.mubr.f32.gmra.mxu0 %v108
    %v221 = vpop.f32.mrf.mxu0
    %v222 = vadd.f32 %v104, %v221
    %v223 = vpop.f32.mrf.mxu0
    %224 = vmatprep.mubr.f32.mxu0 0.0
    %225 = vmatmul.mubr.f32.gmra.mxu0 %v111
    %v226 = vpop.f32.mrf.mxu0
    %v227 = vadd.f32 %v104, %v226
    %v228 = vpop.f32.mrf.mxu0
    %229 = vmatprep.mubr.f32.mxu0 0.0
    %230 = vmatmul.mubr.f32.gmra.mxu0 %v114
    %v231 = vpop.f32.mrf.mxu0
    %v232 = vadd.f32 %v104, %v231
    %v233 = vpop.f32.mrf.mxu0
    %234 = vmatprep.mubr.f32.mxu0 0.0
    %235 = vmatmul.mubr.f32.gmra.mxu0 %v117
    %v236 = vpop.f32.mrf.mxu0
    %v237 = vadd.f32 %v104, %v236
    %v238 = vpop.f32.mrf.mxu0
    %239 = vmatprep.mubr.f32.mxu0 0.0
    %240 = vmatmul.mubr.f32.gmra.mxu0 %v120
    %v241 = vpop.f32.mrf.mxu0
    %v242 = vadd.f32 %v104, %v241
    %v243 = vpop.f32.mrf.mxu0
    %244 = vmatprep.mubr.f32.mxu0 0.0
    %245 = vmatmul.mubr.f32.gmra.mxu0 %v123
    %v246 = vpop.f32.mrf.mxu0
    %v247 = vadd.f32 %v104, %v246
    %v248 = vpop.f32.mrf.mxu0
    %249 = vmatprep.mubr.f32.mxu0 0.0
    %250 = vmatmul.mubr.f32.gmra.mxu0 %v126
    %v251 = vpop.f32.mrf.mxu0
    %v252 = vadd.f32 %v104, %v251
    %v253 = vpop.f32.mrf.mxu0
    %254 = vmatprep.mubr.f32.mxu0 0.0
    %255 = vmatmul.mubr.f32.gmra.mxu0 %v129
    %v256 = vpop.f32.mrf.mxu0
    %v257 = vadd.f32 %v104, %v256
    %v258 = vpop.f32.mrf.mxu0
    %259 = vmatprep.mubr.f32.mxu0 0.0
    %260 = vmatmul.mubr.f32.gmra.mxu0 %v132
    %v261 = vpop.f32.mrf.mxu0
    %v262 = vadd.f32 %v104, %v261
    %v263 = vpop.f32.mrf.mxu0
    %264 = vmatprep.mubr.f32.mxu0 0.0
    %265 = vmatmul.mubr.f32.gmra.mxu0 %v135
    %v266 = vpop.f32.mrf.mxu0
    %v267 = vadd.f32 %v104, %v266
    %v268 = vpop.f32.mrf.mxu0
    %269 = vmatprep.mubr.f32.mxu0 0.0
    %270 = vmatmul.mubr.f32.gmra.mxu0 %v138
    %v271 = vpop.f32.mrf.mxu0
    %v272 = vadd.f32 %v104, %v271
    %v273 = vpop.f32.mrf.mxu0
    %274 = vmatprep.mubr.f32.mxu0 0.0
    %275 = vmatmul.mubr.f32.gmra.mxu0 %v141
    %v276 = vpop.f32.mrf.mxu0
    %v277 = vadd.f32 %v104, %v276
    %v278 = vpop.f32.mrf.mxu0
    %279 = vmatprep.mubr.f32.mxu0 0.0
    %280 = vmatmul.mubr.f32.gmra.mxu0 %v144
    %v281 = vpop.f32.mrf.mxu0
    %v282 = vadd.f32 %v104, %v281
    %v283 = vpop.f32.mrf.mxu0
    %284 = vmatprep.mubr.f32.mxu0 0.0
    %285 = vmatmul.mubr.f32.gmra.mxu0 %v147
    %v286 = vpop.f32.mrf.mxu0
    %v287 = vadd.f32 %v104, %v286
    %v288 = vpop.f32.mrf.mxu0
    %289 = vmatprep.mubr.f32.mxu0 0.0
    %290 = vmatmul.mubr.f32.gmra.mxu0 %v150
    %v291 = vpop.f32.mrf.mxu0
    %v292 = vadd.f32 %v104, %v291
    %v293 = vpop.f32.mrf.mxu0
    %294 = vmatprep.mubr.f32.mxu0 0.0
    %295 = vmatmul.mubr.f32.gmra.mxu0 %v153
    %v296 = vpop.f32.mrf.mxu0
    %v297 = vadd.f32 %v104, %v296
    %v298 = vpop.f32.mrf.mxu0
    %299 = vdwg.mxu0
    %300 = vst [vmem:[#allocation2] sm:$0xff] %v222
    %301 = vst [vmem:[#allocation2 + $0x8] sm:$0xff] %v227
    %302 = vst [vmem:[#allocation2 + $0x10] sm:$0xff] %v232
    %303 = vst [vmem:[#allocation2 + $0x18] sm:$0xff] %v237
    %304 = vst [vmem:[#allocation2 + $0x20] sm:$0xff] %v242
    %305 = vst [vmem:[#allocation2 + $0x28] sm:$0xff] %v247
    %306 = vst [vmem:[#allocation2 + $0x30] sm:$0xff] %v252
    %307 = vst [vmem:[#allocation2 + $0x38] sm:$0xff] %v257
    %308 = vst [vmem:[#allocation2 + $0x40] sm:$0xff] %v262
    %309 = vst [vmem:[#allocation2 + $0x48] sm:$0xff] %v267
    %310 = vst [vmem:[#allocation2 + $0x50] sm:$0xff] %v272
    %311 = vst [vmem:[#allocation2 + $0x58] sm:$0xff] %v277
    %312 = vst [vmem:[#allocation2 + $0x60] sm:$0xff] %v282
    %313 = vst [vmem:[#allocation2 + $0x68] sm:$0xff] %v287
    %314 = vst [vmem:[#allocation2 + $0x70] sm:$0xff] %v292
    %315 = vst [vmem:[#allocation2 + $0x78] sm:$0xff] %v297
    %v316 = vld [vmem:[%s2] sm:$0xff]
    %v317 = vld [vmem:[%s2 + $0x8] sm:$0xff]
    %v318 = vld [vmem:[%s2 + $0x10] sm:$0xff]
    %v319 = vld [vmem:[%s2 + $0x18] sm:$0xff]
    %v320 = vld [vmem:[#allocation7] sm:$0xff]
    %v321 = vld [vmem:[#allocation7 + $0x8] sm:$0xff]
    %v322 = vld [vmem:[#allocation9] sm:$0xff]
    %v323 = vld [vmem:[#allocation9 + $0x8] sm:$0xff]
    %v324 = vld [vmem:[#allocation2] sm:$0xff]
    %v325 = vld [vmem:[#allocation2 + $0x8] sm:$0xff]
    %vm326 = vcmask 261120
    %v328 = vsel %vm326, %v320, 0
    %v331 = vsel %vm326, %v321, 0
    %333 = vmatprep.subr.mxu0 0.0
    %334 = vmatpush1.msra.mxu0 0.0
    %335 = vmatprep.subr.mxu0 0.0
    %336 = vmatpush1.msra.mxu0 0.0
    %337 = vmatprep.subr.mxu0 0.0
    %338 = vmatpush1.msra.mxu0 0.0
    %339 = vmatprep.subr.mxu0 0.0
    %340 = vmatpush1.msra.mxu0 0.0
    %341 = vmatprep.subr.mxu0 0.0
    %342 = vmatpush1.msra.mxu0 0.0
    %343 = vmatprep.subr.mxu0 0.0
    %344 = vmatpush1.msra.mxu0 0.0
    %345 = vmatprep.subr.mxu0 0.0
    %346 = vmatpush1.msra.mxu0 0.0
    %347 = vmatprep.subr.mxu0 0.0
    %348 = vmatpush1.msra.mxu0 0.0
    %349 = vmatprep.subr.mxu0 0.0
    %350 = vmatpush1.msra.mxu0 0.0
    %351 = vmatprep.subr.mxu0 0.0
    %352 = vmatpush1.msra.mxu0 0.0
    %353 = vmatprep.subr.mxu0 0.0
    %354 = vmatpush1.msra.mxu0 0.0
    %355 = vmatprep.subr.mxu0 0.0
    %356 = vmatpush1.msra.mxu0 0.0
    %357 = vmatprep.subr.mxu0 0.0
    %358 = vmatpush1.msra.mxu0 %v319
    %359 = vmatprep.subr.mxu0 0.0
    %360 = vmatpush1.msra.mxu0 %v318
    %361 = vmatprep.subr.mxu0 0.0
    %362 = vmatpush1.msra.mxu0 %v317
    %363 = vmatprep.subr.mxu0 0.0
    %364 = vmatpush1.msra.mxu0 %v316
    %365 = vmatprep.subr.mxu0 0.0
    %366 = vmatpush2.msra.mxu0 0.0
    %367 = vmatprep.subr.mxu0 0.0
    %368 = vmatpush2.msra.mxu0 0.0
    %369 = vmatprep.subr.mxu0 0.0
    %370 = vmatpush2.msra.mxu0 0.0
    %371 = vmatprep.subr.mxu0 0.0
    %372 = vmatpush2.msra.mxu0 0.0
    %373 = vmatprep.subr.mxu0 0.0
    %374 = vmatpush2.msra.mxu0 0.0
    %375 = vmatprep.subr.mxu0 0.0
    %376 = vmatpush2.msra.mxu0 0.0
    %377 = vmatprep.subr.mxu0 0.0
    %378 = vmatpush2.msra.mxu0 0.0
    %379 = vmatprep.subr.mxu0 0.0
    %380 = vmatpush2.msra.mxu0 0.0
    %381 = vmatprep.subr.mxu0 0.0
    %382 = vmatpush2.msra.mxu0 0.0
    %383 = vmatprep.subr.mxu0 0.0
    %384 = vmatpush2.msra.mxu0 0.0
    %385 = vmatprep.subr.mxu0 0.0
    %386 = vmatpush2.msra.mxu0 0.0
    %387 = vmatprep.subr.mxu0 0.0
    %388 = vmatpush2.msra.mxu0 0.0
    %389 = vmatprep.subr.mxu0 0.0
    %390 = vmatpush2.msra.mxu0 0.0
    %391 = vmatprep.subr.mxu0 0.0
    %392 = vmatpush2.msra.mxu0 0.0
    %393 = vmatprep.subr.mxu0 0.0
    %394 = vmatpush2.msra.mxu0 0.0
    %395 = vmatprep.subr.mxu0 0.0
    %396 = vmatpush2.msra.mxu0 0.0
    %397 = vmatprep.mubr.f32.mxu0 0.0
    %398 = vmatmul.mubr.f32.gmra.mxu0 %v328
    %v399 = vpop.f32.mrf.mxu0
    %v400 = vadd.f32 0.0, %v399
    %v401 = vpop.f32.mrf.mxu0
    %402 = vmatprep.mubr.f32.mxu0 0.0
    %403 = vmatmul.mubr.f32.gmra.mxu0 %v331
    %v404 = vpop.f32.mrf.mxu0
    %v405 = vadd.f32 0.0, %v404
    %v406 = vpop.f32.mrf.mxu0
    %407 = vdwg.mxu0
    %v408 = vadd.f32 %v324, %v400
    %v409 = vadd.f32 %v325, %v405
    %v410 = vxor.u32 %v408, 2147483648
    %v411 = vxor.u32 %v409, 2147483648
    %v412 = vmul.f32 %v410, 1.442695
    %v413 = vpow.pop %v412
    %v414 = vmul.f32 %v411, 1.442695
    %v415 = vpow.pop %v414
    %v416 = vadd.f32 %v413, 1.0
    %v417 = vadd.f32 %v415, 1.0
    %v418 = vrcp.pop %v416
    %v419 = vmul.f32 1.0, %v418
    %v420 = vrcp.pop %v417
    %v421 = vmul.f32 1.0, %v420
    %v422 = vtanh.pop %v408
    %v423 = vtanh.pop %v409
    %426 = vrot.lane.b32.xlu0 %v322, 32
    %v427 = vpop.permute.xlu0 %426
    %428 = vrot.lane.b32.xlu0 %v323, 32
    %v429 = vpop.permute.xlu0 %428
    %v432 = vmul.f32 %v419, %v427
    %v433 = vmul.f32 %v421, %v429
    %436 = vrot.lane.b32.xlu0 %v422, 64
    %v437 = vpop.permute.xlu0 %436
    %438 = vrot.lane.b32.xlu0 %v423, 64
    %v439 = vpop.permute.xlu0 %438
    %v442 = vmul.f32 %v419, %v437
    %v443 = vmul.f32 %v421, %v439
    %446 = vrot.lane.b32.xlu0 %v442, 32
    %v447 = vpop.permute.xlu0 %446
    %448 = vrot.lane.b32.xlu0 %v443, 32
    %v449 = vpop.permute.xlu0 %448
    %v452 = vadd.f32 %v432, %v447
    %v453 = vadd.f32 %v433, %v449
    %v454 = vtanh.pop %v452
    %v455 = vtanh.pop %v453
    %458 = vrot.lane.b32.xlu0 %v454, 64
    %v459 = vpop.permute.xlu0 %458
    %460 = vrot.lane.b32.xlu0 %v455, 64
    %v461 = vpop.permute.xlu0 %460
    %v464 = vmul.f32 %v419, %v459
    %v465 = vmul.f32 %v421, %v461
    %468 = vrot.lane.b32.xlu0 %v464, 32
    %v469 = vpop.permute.xlu0 %468
    %470 = vrot.lane.b32.xlu0 %v465, 32
    %v471 = vpop.permute.xlu0 %470
    %474 = vst.msk [vmem:[#allocation3] sm:$0xff] %vm326, %v469
    %475 = vst.msk [vmem:[#allocation3 + $0x8] sm:$0xff] %vm326, %v471
    %s476 = scalar_lea.vmem [#allocation2], 16
    %v477 = vld [vmem:[%s476] sm:$0xff]
    %v478 = vld [vmem:[%s476 + $0x8] sm:$0xff]
    %v479 = vsel %vm326, %v469, 0
    %v481 = vsel %vm326, %v471, 0
    %483 = vmatprep.subr.mxu0 0.0
    %484 = vmatpush1.msra.mxu0 0.0
    %485 = vmatprep.subr.mxu0 0.0
    %486 = vmatpush1.msra.mxu0 0.0
    %487 = vmatprep.subr.mxu0 0.0
    %488 = vmatpush1.msra.mxu0 0.0
    %489 = vmatprep.subr.mxu0 0.0
    %490 = vmatpush1.msra.mxu0 0.0
    %491 = vmatprep.subr.mxu0 0.0
    %492 = vmatpush1.msra.mxu0 0.0
    %493 = vmatprep.subr.mxu0 0.0
    %494 = vmatpush1.msra.mxu0 0.0
    %495 = vmatprep.subr.mxu0 0.0
    %496 = vmatpush1.msra.mxu0 0.0
    %497 = vmatprep.subr.mxu0 0.0
    %498 = vmatpush1.msra.mxu0 0.0
    %499 = vmatprep.subr.mxu0 0.0
    %500 = vmatpush1.msra.mxu0 0.0
    %501 = vmatprep.subr.mxu0 0.0
    %502 = vmatpush1.msra.mxu0 0.0
    %503 = vmatprep.subr.mxu0 0.0
    %504 = vmatpush1.msra.mxu0 0.0
    %505 = vmatprep.subr.mxu0 0.0
    %506 = vmatpush1.msra.mxu0 0.0
    %507 = vmatprep.subr.mxu0 0.0
    %508 = vmatpush1.msra.mxu0 %v319
    %509 = vmatprep.subr.mxu0 0.0
    %510 = vmatpush1.msra.mxu0 %v318
    %511 = vmatprep.subr.mxu0 0.0
    %512 = vmatpush1.msra.mxu0 %v317
    %513 = vmatprep.subr.mxu0 0.0
    %514 = vmatpush1.msra.mxu0 %v316
    %515 = vmatprep.subr.mxu0 0.0
    %516 = vmatpush2.msra.mxu0 0.0
    %517 = vmatprep.subr.mxu0 0.0
    %518 = vmatpush2.msra.mxu0 0.0
    %519 = vmatprep.subr.mxu0 0.0
    %520 = vmatpush2.msra.mxu0 0.0
    %521 = vmatprep.subr.mxu0 0.0
    %522 = vmatpush2.msra.mxu0 0.0
    %523 = vmatprep.subr.mxu0 0.0
    %524 = vmatpush2.msra.mxu0 0.0
    %525 = vmatprep.subr.mxu0 0.0
    %526 = vmatpush2.msra.mxu0 0.0
    %527 = vmatprep.subr.mxu0 0.0
    %528 = vmatpush2.msra.mxu0 0.0
    %529 = vmatprep.subr.mxu0 0.0
    %530 = vmatpush2.msra.mxu0 0.0
    %531 = vmatprep.subr.mxu0 0.0
    %532 = vmatpush2.msra.mxu0 0.0
    %533 = vmatprep.subr.mxu0 0.0
    %534 = vmatpush2.msra.mxu0 0.0
    %535 = vmatprep.subr.mxu0 0.0
    %536 = vmatpush2.msra.mxu0 0.0
    %537 = vmatprep.subr.mxu0 0.0
    %538 = vmatpush2.msra.mxu0 0.0
    %539 = vmatprep.subr.mxu0 0.0
    %540 = vmatpush2.msra.mxu0 0.0
    %541 = vmatprep.subr.mxu0 0.0
    %542 = vmatpush2.msra.mxu0 0.0
    %543 = vmatprep.subr.mxu0 0.0
    %544 = vmatpush2.msra.mxu0 0.0
    %545 = vmatprep.subr.mxu0 0.0
    %546 = vmatpush2.msra.mxu0 0.0
    %547 = vmatprep.mubr.f32.mxu0 0.0
    %548 = vmatmul.mubr.f32.gmra.mxu0 %v479
    %v549 = vpop.f32.mrf.mxu0
    %v550 = vadd.f32 0.0, %v549
    %v551 = vpop.f32.mrf.mxu0
    %552 = vmatprep.mubr.f32.mxu0 0.0
    %553 = vmatmul.mubr.f32.gmra.mxu0 %v481
    %v554 = vpop.f32.mrf.mxu0
    %v555 = vadd.f32 0.0, %v554
    %v556 = vpop.f32.mrf.mxu0
    %557 = vdwg.mxu0
    %v558 = vadd.f32 %v477, %v550
    %v559 = vadd.f32 %v478, %v555
    %v560 = vxor.u32 %v558, 2147483648
    %v561 = vxor.u32 %v559, 2147483648
    %v562 = vmul.f32 %v560, 1.442695
    %v563 = vpow.pop %v562
    %v564 = vmul.f32 %v561, 1.442695
    %v565 = vpow.pop %v564
    %v566 = vadd.f32 %v563, 1.0
    %v567 = vadd.f32 %v565, 1.0
    %v568 = vrcp.pop %v566
    %v569 = vmul.f32 1.0, %v568
    %v570 = vrcp.pop %v567
    %v571 = vmul.f32 1.0, %v570
    %v572 = vtanh.pop %v558
    %v573 = vtanh.pop %v559
    %v574 = vmul.f32 %v569, %v452
    %v575 = vmul.f32 %v571, %v453
    %578 = vrot.lane.b32.xlu0 %v572, 64
    %v579 = vpop.permute.xlu0 %578
    %580 = vrot.lane.b32.xlu0 %v573, 64
    %v581 = vpop.permute.xlu0 %580
    %v584 = vmul.f32 %v569, %v579
    %v585 = vmul.f32 %v571, %v581
    %588 = vrot.lane.b32.xlu0 %v584, 32
    %v589 = vpop.permute.xlu0 %588
    %590 = vrot.lane.b32.xlu0 %v585, 32
    %v591 = vpop.permute.xlu0 %590
    %v594 = vadd.f32 %v574, %v589
    %v595 = vadd.f32 %v575, %v591
    %v596 = vtanh.pop %v594
    %v597 = vtanh.pop %v595
    %600 = vrot.lane.b32.xlu0 %v596, 64
    %v601 = vpop.permute.xlu0 %600
    %602 = vrot.lane.b32.xlu0 %v597, 64
    %v603 = vpop.permute.xlu0 %602
    %v606 = vmul.f32 %v569, %v601
    %v607 = vmul.f32 %v571, %v603
    %610 = vrot.lane.b32.xlu0 %v606, 32
    %v611 = vpop.permute.xlu0 %610
    %612 = vrot.lane.b32.xlu0 %v607, 32
    %v613 = vpop.permute.xlu0 %612
    %s616 = scalar_lea.vmem [#allocation3], 16
    %617 = vst.msk [vmem:[%s616] sm:$0xff] %vm326, %v611
    %618 = vst.msk [vmem:[%s616 + $0x8] sm:$0xff] %vm326, %v613
    %s619 = scalar_lea.vmem [#allocation2], 32
    %v620 = vld [vmem:[%s619] sm:$0xff]
    %v621 = vld [vmem:[%s619 + $0x8] sm:$0xff]
    %v622 = vsel %vm326, %v611, 0
    %v624 = vsel %vm326, %v613, 0
    %626 = vmatprep.subr.mxu0 0.0
    %627 = vmatpush1.msra.mxu0 0.0
    %628 = vmatprep.subr.mxu0 0.0
    %629 = vmatpush1.msra.mxu0 0.0
    %630 = vmatprep.subr.mxu0 0.0
    %631 = vmatpush1.msra.mxu0 0.0
    %632 = vmatprep.subr.mxu0 0.0
    %633 = vmatpush1.msra.mxu0 0.0
    %634 = vmatprep.subr.mxu0 0.0
    %635 = vmatpush1.msra.mxu0 0.0
    %636 = vmatprep.subr.mxu0 0.0
    %637 = vmatpush1.msra.mxu0 0.0
    %638 = vmatprep.subr.mxu0 0.0
    %639 = vmatpush1.msra.mxu0 0.0
    %640 = vmatprep.subr.mxu0 0.0
    %641 = vmatpush1.msra.mxu0 0.0
    %642 = vmatprep.subr.mxu0 0.0
    %643 = vmatpush1.msra.mxu0 0.0
    %644 = vmatprep.subr.mxu0 0.0
    %645 = vmatpush1.msra.mxu0 0.0
    %646 = vmatprep.subr.mxu0 0.0
    %647 = vmatpush1.msra.mxu0 0.0
    %648 = vmatprep.subr.mxu0 0.0
    %649 = vmatpush1.msra.mxu0 0.0
    %650 = vmatprep.subr.mxu0 0.0
    %651 = vmatpush1.msra.mxu0 %v319
    %652 = vmatprep.subr.mxu0 0.0
    %653 = vmatpush1.msra.mxu0 %v318
    %654 = vmatprep.subr.mxu0 0.0
    %655 = vmatpush1.msra.mxu0 %v317
    %656 = vmatprep.subr.mxu0 0.0
    %657 = vmatpush1.msra.mxu0 %v316
    %658 = vmatprep.subr.mxu0 0.0
    %659 = vmatpush2.msra.mxu0 0.0
    %660 = vmatprep.subr.mxu0 0.0
    %661 = vmatpush2.msra.mxu0 0.0
    %662 = vmatprep.subr.mxu0 0.0
    %663 = vmatpush2.msra.mxu0 0.0
    %664 = vmatprep.subr.mxu0 0.0
    %665 = vmatpush2.msra.mxu0 0.0
    %666 = vmatprep.subr.mxu0 0.0
    %667 = vmatpush2.msra.mxu0 0.0
    %668 = vmatprep.subr.mxu0 0.0
    %669 = vmatpush2.msra.mxu0 0.0
    %670 = vmatprep.subr.mxu0 0.0
    %671 = vmatpush2.msra.mxu0 0.0
    %672 = vmatprep.subr.mxu0 0.0
    %673 = vmatpush2.msra.mxu0 0.0
    %674 = vmatprep.subr.mxu0 0.0
    %675 = vmatpush2.msra.mxu0 0.0
    %676 = vmatprep.subr.mxu0 0.0
    %677 = vmatpush2.msra.mxu0 0.0
    %678 = vmatprep.subr.mxu0 0.0
    %679 = vmatpush2.msra.mxu0 0.0
    %680 = vmatprep.subr.mxu0 0.0
    %681 = vmatpush2.msra.mxu0 0.0
    %682 = vmatprep.subr.mxu0 0.0
    %683 = vmatpush2.msra.mxu0 0.0
    %684 = vmatprep.subr.mxu0 0.0
    %685 = vmatpush2.msra.mxu0 0.0
    %686 = vmatprep.subr.mxu0 0.0
    %687 = vmatpush2.msra.mxu0 0.0
    %688 = vmatprep.subr.mxu0 0.0
    %689 = vmatpush2.msra.mxu0 0.0
    %690 = vmatprep.mubr.f32.mxu0 0.0
    %691 = vmatmul.mubr.f32.gmra.mxu0 %v622
    %v692 = vpop.f32.mrf.mxu0
    %v693 = vadd.f32 0.0, %v692
    %v694 = vpop.f32.mrf.mxu0
    %695 = vmatprep.mubr.f32.mxu0 0.0
    %696 = vmatmul.mubr.f32.gmra.mxu0 %v624
    %v697 = vpop.f32.mrf.mxu0
    %v698 = vadd.f32 0.0, %v697
    %v699 = vpop.f32.mrf.mxu0
    %700 = vdwg.mxu0
    %v701 = vadd.f32 %v620, %v693
    %v702 = vadd.f32 %v621, %v698
    %v703 = vxor.u32 %v701, 2147483648
    %v704 = vxor.u32 %v702, 2147483648
    %v705 = vmul.f32 %v703, 1.442695
    %v706 = vpow.pop %v705
    %v707 = vmul.f32 %v704, 1.442695
    %v708 = vpow.pop %v707
    %v709 = vadd.f32 %v706, 1.0
    %v710 = vadd.f32 %v708, 1.0
    %v711 = vrcp.pop %v709
    %v712 = vmul.f32 1.0, %v711
    %v713 = vrcp.pop %v710
    %v714 = vmul.f32 1.0, %v713
    %v715 = vtanh.pop %v701
    %v716 = vtanh.pop %v702
    %v717 = vmul.f32 %v712, %v594
    %v718 = vmul.f32 %v714, %v595
    %721 = vrot.lane.b32.xlu0 %v715, 64
    %v722 = vpop.permute.xlu0 %721
    %723 = vrot.lane.b32.xlu0 %v716, 64
    %v724 = vpop.permute.xlu0 %723
    %v727 = vmul.f32 %v712, %v722
    %v728 = vmul.f32 %v714, %v724
    %731 = vrot.lane.b32.xlu0 %v727, 32
    %v732 = vpop.permute.xlu0 %731
    %733 = vrot.lane.b32.xlu0 %v728, 32
    %v734 = vpop.permute.xlu0 %733
    %v737 = vadd.f32 %v717, %v732
    %v738 = vadd.f32 %v718, %v734
    %v739 = vtanh.pop %v737
    %v740 = vtanh.pop %v738
    %743 = vrot.lane.b32.xlu0 %v739, 64
    %v744 = vpop.permute.xlu0 %743
    %745 = vrot.lane.b32.xlu0 %v740, 64
    %v746 = vpop.permute.xlu0 %745
    %v749 = vmul.f32 %v712, %v744
    %v750 = vmul.f32 %v714, %v746
    %753 = vrot.lane.b32.xlu0 %v749, 32
    %v754 = vpop.permute.xlu0 %753
    %755 = vrot.lane.b32.xlu0 %v750, 32
    %v756 = vpop.permute.xlu0 %755
    %s759 = scalar_lea.vmem [#allocation3], 32
    %760 = vst.msk [vmem:[%s759] sm:$0xff] %vm326, %v754
    %761 = vst.msk [vmem:[%s759 + $0x8] sm:$0xff] %vm326, %v756
    %s762 = scalar_lea.vmem [#allocation2], 48
    %v763 = vld [vmem:[%s762] sm:$0xff]
    %v764 = vld [vmem:[%s762 + $0x8] sm:$0xff]
    %v765 = vsel %vm326, %v754, 0
    %v767 = vsel %vm326, %v756, 0
    %769 = vmatprep.subr.mxu0 0.0
    %770 = vmatpush1.msra.mxu0 0.0
    %771 = vmatprep.subr.mxu0 0.0
    %772 = vmatpush1.msra.mxu0 0.0
    %773 = vmatprep.subr.mxu0 0.0
    %774 = vmatpush1.msra.mxu0 0.0
    %775 = vmatprep.subr.mxu0 0.0
    %776 = vmatpush1.msra.mxu0 0.0
    %777 = vmatprep.subr.mxu0 0.0
    %778 = vmatpush1.msra.mxu0 0.0
    %779 = vmatprep.subr.mxu0 0.0
    %780 = vmatpush1.msra.mxu0 0.0
    %781 = vmatprep.subr.mxu0 0.0
    %782 = vmatpush1.msra.mxu0 0.0
    %783 = vmatprep.subr.mxu0 0.0
    %784 = vmatpush1.msra.mxu0 0.0
    %785 = vmatprep.subr.mxu0 0.0
    %786 = vmatpush1.msra.mxu0 0.0
    %787 = vmatprep.subr.mxu0 0.0
    %788 = vmatpush1.msra.mxu0 0.0
    %789 = vmatprep.subr.mxu0 0.0
    %790 = vmatpush1.msra.mxu0 0.0
    %791 = vmatprep.subr.mxu0 0.0
    %792 = vmatpush1.msra.mxu0 0.0
    %793 = vmatprep.subr.mxu0 0.0
    %794 = vmatpush1.msra.mxu0 %v319
    %795 = vmatprep.subr.mxu0 0.0
    %796 = vmatpush1.msra.mxu0 %v318
    %797 = vmatprep.subr.mxu0 0.0
    %798 = vmatpush1.msra.mxu0 %v317
    %799 = vmatprep.subr.mxu0 0.0
    %800 = vmatpush1.msra.mxu0 %v316
    %801 = vmatprep.subr.mxu0 0.0
    %802 = vmatpush2.msra.mxu0 0.0
    %803 = vmatprep.subr.mxu0 0.0
    %804 = vmatpush2.msra.mxu0 0.0
    %805 = vmatprep.subr.mxu0 0.0
    %806 = vmatpush2.msra.mxu0 0.0
    %807 = vmatprep.subr.mxu0 0.0
    %808 = vmatpush2.msra.mxu0 0.0
    %809 = vmatprep.subr.mxu0 0.0
    %810 = vmatpush2.msra.mxu0 0.0
    %811 = vmatprep.subr.mxu0 0.0
    %812 = vmatpush2.msra.mxu0 0.0
    %813 = vmatprep.subr.mxu0 0.0
    %814 = vmatpush2.msra.mxu0 0.0
    %815 = vmatprep.subr.mxu0 0.0
    %816 = vmatpush2.msra.mxu0 0.0
    %817 = vmatprep.subr.mxu0 0.0
    %818 = vmatpush2.msra.mxu0 0.0
    %819 = vmatprep.subr.mxu0 0.0
    %820 = vmatpush2.msra.mxu0 0.0
    %821 = vmatprep.subr.mxu0 0.0
    %822 = vmatpush2.msra.mxu0 0.0
    %823 = vmatprep.subr.mxu0 0.0
    %824 = vmatpush2.msra.mxu0 0.0
    %825 = vmatprep.subr.mxu0 0.0
    %826 = vmatpush2.msra.mxu0 0.0
    %827 = vmatprep.subr.mxu0 0.0
    %828 = vmatpush2.msra.mxu0 0.0
    %829 = vmatprep.subr.mxu0 0.0
    %830 = vmatpush2.msra.mxu0 0.0
    %831 = vmatprep.subr.mxu0 0.0
    %832 = vmatpush2.msra.mxu0 0.0
    %833 = vmatprep.mubr.f32.mxu0 0.0
    %834 = vmatmul.mubr.f32.gmra.mxu0 %v765
    %v835 = vpop.f32.mrf.mxu0
    %v836 = vadd.f32 0.0, %v835
    %v837 = vpop.f32.mrf.mxu0
    %838 = vmatprep.mubr.f32.mxu0 0.0
    %839 = vmatmul.mubr.f32.gmra.mxu0 %v767
    %v840 = vpop.f32.mrf.mxu0
    %v841 = vadd.f32 0.0, %v840
    %v842 = vpop.f32.mrf.mxu0
    %843 = vdwg.mxu0
    %v844 = vadd.f32 %v763, %v836
    %v845 = vadd.f32 %v764, %v841
    %v846 = vxor.u32 %v844, 2147483648
    %v847 = vxor.u32 %v845, 2147483648
    %v848 = vmul.f32 %v846, 1.442695
    %v849 = vpow.pop %v848
    %v850 = vmul.f32 %v847, 1.442695
    %v851 = vpow.pop %v850
    %v852 = vadd.f32 %v849, 1.0
    %v853 = vadd.f32 %v851, 1.0
    %v854 = vrcp.pop %v852
    %v855 = vmul.f32 1.0, %v854
    %v856 = vrcp.pop %v853
    %v857 = vmul.f32 1.0, %v856
    %v858 = vtanh.pop %v844
    %v859 = vtanh.pop %v845
    %v860 = vmul.f32 %v855, %v737
    %v861 = vmul.f32 %v857, %v738
    %864 = vrot.lane.b32.xlu0 %v858, 64
    %v865 = vpop.permute.xlu0 %864
    %866 = vrot.lane.b32.xlu0 %v859, 64
    %v867 = vpop.permute.xlu0 %866
    %v870 = vmul.f32 %v855, %v865
    %v871 = vmul.f32 %v857, %v867
    %874 = vrot.lane.b32.xlu0 %v870, 32
    %v875 = vpop.permute.xlu0 %874
    %876 = vrot.lane.b32.xlu0 %v871, 32
    %v877 = vpop.permute.xlu0 %876
    %v880 = vadd.f32 %v860, %v875
    %v881 = vadd.f32 %v861, %v877
    %v882 = vtanh.pop %v880
    %v883 = vtanh.pop %v881
    %886 = vrot.lane.b32.xlu0 %v882, 64
    %v887 = vpop.permute.xlu0 %886
    %888 = vrot.lane.b32.xlu0 %v883, 64
    %v889 = vpop.permute.xlu0 %888
    %v892 = vmul.f32 %v855, %v887
    %v893 = vmul.f32 %v857, %v889
    %896 = vrot.lane.b32.xlu0 %v892, 32
    %v897 = vpop.permute.xlu0 %896
    %898 = vrot.lane.b32.xlu0 %v893, 32
    %v899 = vpop.permute.xlu0 %898
    %s902 = scalar_lea.vmem [#allocation3], 48
    %903 = vst.msk [vmem:[%s902] sm:$0xff] %vm326, %v897
    %904 = vst.msk [vmem:[%s902 + $0x8] sm:$0xff] %vm326, %v899
    %s905 = scalar_lea.vmem [#allocation2], 64
    %v906 = vld [vmem:[%s905] sm:$0xff]
    %v907 = vld [vmem:[%s905 + $0x8] sm:$0xff]
    %v908 = vsel %vm326, %v897, 0
    %v910 = vsel %vm326, %v899, 0
    %912 = vmatprep.subr.mxu0 0.0
    %913 = vmatpush1.msra.mxu0 0.0
    %914 = vmatprep.subr.mxu0 0.0
    %915 = vmatpush1.msra.mxu0 0.0
    %916 = vmatprep.subr.mxu0 0.0
    %917 = vmatpush1.msra.mxu0 0.0
    %918 = vmatprep.subr.mxu0 0.0
    %919 = vmatpush1.msra.mxu0 0.0
    %920 = vmatprep.subr.mxu0 0.0
    %921 = vmatpush1.msra.mxu0 0.0
    %922 = vmatprep.subr.mxu0 0.0
    %923 = vmatpush1.msra.mxu0 0.0
    %924 = vmatprep.subr.mxu0 0.0
    %925 = vmatpush1.msra.mxu0 0.0
    %926 = vmatprep.subr.mxu0 0.0
    %927 = vmatpush1.msra.mxu0 0.0
    %928 = vmatprep.subr.mxu0 0.0
    %929 = vmatpush1.msra.mxu0 0.0
    %930 = vmatprep.subr.mxu0 0.0
    %931 = vmatpush1.msra.mxu0 0.0
    %932 = vmatprep.subr.mxu0 0.0
    %933 = vmatpush1.msra.mxu0 0.0
    %934 = vmatprep.subr.mxu0 0.0
    %935 = vmatpush1.msra.mxu0 0.0
    %936 = vmatprep.subr.mxu0 0.0
    %937 = vmatpush1.msra.mxu0 %v319
    %938 = vmatprep.subr.mxu0 0.0
    %939 = vmatpush1.msra.mxu0 %v318
    %940 = vmatprep.subr.mxu0 0.0
    %941 = vmatpush1.msra.mxu0 %v317
    %942 = vmatprep.subr.mxu0 0.0
    %943 = vmatpush1.msra.mxu0 %v316
    %944 = vmatprep.subr.mxu0 0.0
    %945 = vmatpush2.msra.mxu0 0.0
    %946 = vmatprep.subr.mxu0 0.0
    %947 = vmatpush2.msra.mxu0 0.0
    %948 = vmatprep.subr.mxu0 0.0
    %949 = vmatpush2.msra.mxu0 0.0
    %950 = vmatprep.subr.mxu0 0.0
    %951 = vmatpush2.msra.mxu0 0.0
    %952 = vmatprep.subr.mxu0 0.0
    %953 = vmatpush2.msra.mxu0 0.0
    %954 = vmatprep.subr.mxu0 0.0
    %955 = vmatpush2.msra.mxu0 0.0
    %956 = vmatprep.subr.mxu0 0.0
    %957 = vmatpush2.msra.mxu0 0.0
    %958 = vmatprep.subr.mxu0 0.0
    %959 = vmatpush2.msra.mxu0 0.0
    %960 = vmatprep.subr.mxu0 0.0
    %961 = vmatpush2.msra.mxu0 0.0
    %962 = vmatprep.subr.mxu0 0.0
    %963 = vmatpush2.msra.mxu0 0.0
    %964 = vmatprep.subr.mxu0 0.0
    %965 = vmatpush2.msra.mxu0 0.0
    %966 = vmatprep.subr.mxu0 0.0
    %967 = vmatpush2.msra.mxu0 0.0
    %968 = vmatprep.subr.mxu0 0.0
    %969 = vmatpush2.msra.mxu0 0.0
    %970 = vmatprep.subr.mxu0 0.0
    %971 = vmatpush2.msra.mxu0 0.0
    %972 = vmatprep.subr.mxu0 0.0
    %973 = vmatpush2.msra.mxu0 0.0
    %974 = vmatprep.subr.mxu0 0.0
    %975 = vmatpush2.msra.mxu0 0.0
    %976 = vmatprep.mubr.f32.mxu0 0.0
    %977 = vmatmul.mubr.f32.gmra.mxu0 %v908
    %v978 = vpop.f32.mrf.mxu0
    %v979 = vadd.f32 0.0, %v978
    %v980 = vpop.f32.mrf.mxu0
    %981 = vmatprep.mubr.f32.mxu0 0.0
    %982 = vmatmul.mubr.f32.gmra.mxu0 %v910
    %v983 = vpop.f32.mrf.mxu0
    %v984 = vadd.f32 0.0, %v983
    %v985 = vpop.f32.mrf.mxu0
    %986 = vdwg.mxu0
    %v987 = vadd.f32 %v906, %v979
    %v988 = vadd.f32 %v907, %v984
    %v989 = vxor.u32 %v987, 2147483648
    %v990 = vxor.u32 %v988, 2147483648
    %v991 = vmul.f32 %v989, 1.442695
    %v992 = vpow.pop %v991
    %v993 = vmul.f32 %v990, 1.442695
    %v994 = vpow.pop %v993
    %v995 = vadd.f32 %v992, 1.0
    %v996 = vadd.f32 %v994, 1.0
    %v997 = vrcp.pop %v995
    %v998 = vmul.f32 1.0, %v997
    %v999 = vrcp.pop %v996
    %v1000 = vmul.f32 1.0, %v999
    %v1001 = vtanh.pop %v987
    %v1002 = vtanh.pop %v988
    %v1003 = vmul.f32 %v998, %v880
    %v1004 = vmul.f32 %v1000, %v881
    %1007 = vrot.lane.b32.xlu0 %v1001, 64
    %v1008 = vpop.permute.xlu0 %1007
    %1009 = vrot.lane.b32.xlu0 %v1002, 64
    %v1010 = vpop.permute.xlu0 %1009
    %v1013 = vmul.f32 %v998, %v1008
    %v1014 = vmul.f32 %v1000, %v1010
    %1017 = vrot.lane.b32.xlu0 %v1013, 32
    %v1018 = vpop.permute.xlu0 %1017
    %1019 = vrot.lane.b32.xlu0 %v1014, 32
    %v1020 = vpop.permute.xlu0 %1019
    %v1023 = vadd.f32 %v1003, %v1018
    %v1024 = vadd.f32 %v1004, %v1020
    %v1025 = vtanh.pop %v1023
    %v1026 = vtanh.pop %v1024
    %1029 = vrot.lane.b32.xlu0 %v1025, 64
    %v1030 = vpop.permute.xlu0 %1029
    %1031 = vrot.lane.b32.xlu0 %v1026, 64
    %v1032 = vpop.permute.xlu0 %1031
    %v1035 = vmul.f32 %v998, %v1030
    %v1036 = vmul.f32 %v1000, %v1032
    %1039 = vrot.lane.b32.xlu0 %v1035, 32
    %v1040 = vpop.permute.xlu0 %1039
    %1041 = vrot.lane.b32.xlu0 %v1036, 32
    %v1042 = vpop.permute.xlu0 %1041
    %s1045 = scalar_lea.vmem [#allocation3], 64
    %1046 = vst.msk [vmem:[%s1045] sm:$0xff] %vm326, %v1040
    %1047 = vst.msk [vmem:[%s1045 + $0x8] sm:$0xff] %vm326, %v1042
    %s1048 = scalar_lea.vmem [#allocation2], 80
    %v1049 = vld [vmem:[%s1048] sm:$0xff]
    %v1050 = vld [vmem:[%s1048 + $0x8] sm:$0xff]
    %v1051 = vsel %vm326, %v1040, 0
    %v1053 = vsel %vm326, %v1042, 0
    %1055 = vmatprep.subr.mxu0 0.0
    %1056 = vmatpush1.msra.mxu0 0.0
    %1057 = vmatprep.subr.mxu0 0.0
    %1058 = vmatpush1.msra.mxu0 0.0
    %1059 = vmatprep.subr.mxu0 0.0
    %1060 = vmatpush1.msra.mxu0 0.0
    %1061 = vmatprep.subr.mxu0 0.0
    %1062 = vmatpush1.msra.mxu0 0.0
    %1063 = vmatprep.subr.mxu0 0.0
    %1064 = vmatpush1.msra.mxu0 0.0
    %1065 = vmatprep.subr.mxu0 0.0
    %1066 = vmatpush1.msra.mxu0 0.0
    %1067 = vmatprep.subr.mxu0 0.0
    %1068 = vmatpush1.msra.mxu0 0.0
    %1069 = vmatprep.subr.mxu0 0.0
    %1070 = vmatpush1.msra.mxu0 0.0
    %1071 = vmatprep.subr.mxu0 0.0
    %1072 = vmatpush1.msra.mxu0 0.0
    %1073 = vmatprep.subr.mxu0 0.0
    %1074 = vmatpush1.msra.mxu0 0.0
    %1075 = vmatprep.subr.mxu0 0.0
    %1076 = vmatpush1.msra.mxu0 0.0
    %1077 = vmatprep.subr.mxu0 0.0
    %1078 = vmatpush1.msra.mxu0 0.0
    %1079 = vmatprep.subr.mxu0 0.0
    %1080 = vmatpush1.msra.mxu0 %v319
    %1081 = vmatprep.subr.mxu0 0.0
    %1082 = vmatpush1.msra.mxu0 %v318
    %1083 = vmatprep.subr.mxu0 0.0
    %1084 = vmatpush1.msra.mxu0 %v317
    %1085 = vmatprep.subr.mxu0 0.0
    %1086 = vmatpush1.msra.mxu0 %v316
    %1087 = vmatprep.subr.mxu0 0.0
    %1088 = vmatpush2.msra.mxu0 0.0
    %1089 = vmatprep.subr.mxu0 0.0
    %1090 = vmatpush2.msra.mxu0 0.0
    %1091 = vmatprep.subr.mxu0 0.0
    %1092 = vmatpush2.msra.mxu0 0.0
    %1093 = vmatprep.subr.mxu0 0.0
    %1094 = vmatpush2.msra.mxu0 0.0
    %1095 = vmatprep.subr.mxu0 0.0
    %1096 = vmatpush2.msra.mxu0 0.0
    %1097 = vmatprep.subr.mxu0 0.0
    %1098 = vmatpush2.msra.mxu0 0.0
    %1099 = vmatprep.subr.mxu0 0.0
    %1100 = vmatpush2.msra.mxu0 0.0
    %1101 = vmatprep.subr.mxu0 0.0
    %1102 = vmatpush2.msra.mxu0 0.0
    %1103 = vmatprep.subr.mxu0 0.0
    %1104 = vmatpush2.msra.mxu0 0.0
    %1105 = vmatprep.subr.mxu0 0.0
    %1106 = vmatpush2.msra.mxu0 0.0
    %1107 = vmatprep.subr.mxu0 0.0
    %1108 = vmatpush2.msra.mxu0 0.0
    %1109 = vmatprep.subr.mxu0 0.0
    %1110 = vmatpush2.msra.mxu0 0.0
    %1111 = vmatprep.subr.mxu0 0.0
    %1112 = vmatpush2.msra.mxu0 0.0
    %1113 = vmatprep.subr.mxu0 0.0
    %1114 = vmatpush2.msra.mxu0 0.0
    %1115 = vmatprep.subr.mxu0 0.0
    %1116 = vmatpush2.msra.mxu0 0.0
    %1117 = vmatprep.subr.mxu0 0.0
    %1118 = vmatpush2.msra.mxu0 0.0
    %1119 = vmatprep.mubr.f32.mxu0 0.0
    %1120 = vmatmul.mubr.f32.gmra.mxu0 %v1051
    %v1121 = vpop.f32.mrf.mxu0
    %v1122 = vadd.f32 0.0, %v1121
    %v1123 = vpop.f32.mrf.mxu0
    %1124 = vmatprep.mubr.f32.mxu0 0.0
    %1125 = vmatmul.mubr.f32.gmra.mxu0 %v1053
    %v1126 = vpop.f32.mrf.mxu0
    %v1127 = vadd.f32 0.0, %v1126
    %v1128 = vpop.f32.mrf.mxu0
    %1129 = vdwg.mxu0
    %v1130 = vadd.f32 %v1049, %v1122
    %v1131 = vadd.f32 %v1050, %v1127
    %v1132 = vxor.u32 %v1130, 2147483648
    %v1133 = vxor.u32 %v1131, 2147483648
    %v1134 = vmul.f32 %v1132, 1.442695
    %v1135 = vpow.pop %v1134
    %v1136 = vmul.f32 %v1133, 1.442695
    %v1137 = vpow.pop %v1136
    %v1138 = vadd.f32 %v1135, 1.0
    %v1139 = vadd.f32 %v1137, 1.0
    %v1140 = vrcp.pop %v1138
    %v1141 = vmul.f32 1.0, %v1140
    %v1142 = vrcp.pop %v1139
    %v1143 = vmul.f32 1.0, %v1142
    %v1144 = vtanh.pop %v1130
    %v1145 = vtanh.pop %v1131
    %v1146 = vmul.f32 %v1141, %v1023
    %v1147 = vmul.f32 %v1143, %v1024
    %1150 = vrot.lane.b32.xlu0 %v1144, 64
    %v1151 = vpop.permute.xlu0 %1150
    %1152 = vrot.lane.b32.xlu0 %v1145, 64
    %v1153 = vpop.permute.xlu0 %1152
    %v1156 = vmul.f32 %v1141, %v1151
    %v1157 = vmul.f32 %v1143, %v1153
    %1160 = vrot.lane.b32.xlu0 %v1156, 32
    %v1161 = vpop.permute.xlu0 %1160
    %1162 = vrot.lane.b32.xlu0 %v1157, 32
    %v1163 = vpop.permute.xlu0 %1162
    %v1166 = vadd.f32 %v1146, %v1161
    %v1167 = vadd.f32 %v1147, %v1163
    %v1168 = vtanh.pop %v1166
    %v1169 = vtanh.pop %v1167
    %1172 = vrot.lane.b32.xlu0 %v1168, 64
    %v1173 = vpop.permute.xlu0 %1172
    %1174 = vrot.lane.b32.xlu0 %v1169, 64
    %v1175 = vpop.permute.xlu0 %1174
    %v1178 = vmul.f32 %v1141, %v1173
    %v1179 = vmul.f32 %v1143, %v1175
    %1182 = vrot.lane.b32.xlu0 %v1178, 32
    %v1183 = vpop.permute.xlu0 %1182
    %1184 = vrot.lane.b32.xlu0 %v1179, 32
    %v1185 = vpop.permute.xlu0 %1184
    %s1188 = scalar_lea.vmem [#allocation3], 80
    %1189 = vst.msk [vmem:[%s1188] sm:$0xff] %vm326, %v1183
    %1190 = vst.msk [vmem:[%s1188 + $0x8] sm:$0xff] %vm326, %v1185
    %s1191 = scalar_lea.vmem [#allocation2], 96
    %v1192 = vld [vmem:[%s1191] sm:$0xff]
    %v1193 = vld [vmem:[%s1191 + $0x8] sm:$0xff]
    %v1194 = vsel %vm326, %v1183, 0
    %v1196 = vsel %vm326, %v1185, 0
    %1198 = vmatprep.subr.mxu0 0.0
    %1199 = vmatpush1.msra.mxu0 0.0
    %1200 = vmatprep.subr.mxu0 0.0
    %1201 = vmatpush1.msra.mxu0 0.0
    %1202 = vmatprep.subr.mxu0 0.0
    %1203 = vmatpush1.msra.mxu0 0.0
    %1204 = vmatprep.subr.mxu0 0.0
    %1205 = vmatpush1.msra.mxu0 0.0
    %1206 = vmatprep.subr.mxu0 0.0
    %1207 = vmatpush1.msra.mxu0 0.0
    %1208 = vmatprep.subr.mxu0 0.0
    %1209 = vmatpush1.msra.mxu0 0.0
    %1210 = vmatprep.subr.mxu0 0.0
    %1211 = vmatpush1.msra.mxu0 0.0
    %1212 = vmatprep.subr.mxu0 0.0
    %1213 = vmatpush1.msra.mxu0 0.0
    %1214 = vmatprep.subr.mxu0 0.0
    %1215 = vmatpush1.msra.mxu0 0.0
    %1216 = vmatprep.subr.mxu0 0.0
    %1217 = vmatpush1.msra.mxu0 0.0
    %1218 = vmatprep.subr.mxu0 0.0
    %1219 = vmatpush1.msra.mxu0 0.0
    %1220 = vmatprep.subr.mxu0 0.0
    %1221 = vmatpush1.msra.mxu0 0.0
    %1222 = vmatprep.subr.mxu0 0.0
    %1223 = vmatpush1.msra.mxu0 %v319
    %1224 = vmatprep.subr.mxu0 0.0
    %1225 = vmatpush1.msra.mxu0 %v318
    %1226 = vmatprep.subr.mxu0 0.0
    %1227 = vmatpush1.msra.mxu0 %v317
    %1228 = vmatprep.subr.mxu0 0.0
    %1229 = vmatpush1.msra.mxu0 %v316
    %1230 = vmatprep.subr.mxu0 0.0
    %1231 = vmatpush2.msra.mxu0 0.0
    %1232 = vmatprep.subr.mxu0 0.0
    %1233 = vmatpush2.msra.mxu0 0.0
    %1234 = vmatprep.subr.mxu0 0.0
    %1235 = vmatpush2.msra.mxu0 0.0
    %1236 = vmatprep.subr.mxu0 0.0
    %1237 = vmatpush2.msra.mxu0 0.0
    %1238 = vmatprep.subr.mxu0 0.0
    %1239 = vmatpush2.msra.mxu0 0.0
    %1240 = vmatprep.subr.mxu0 0.0
    %1241 = vmatpush2.msra.mxu0 0.0
    %1242 = vmatprep.subr.mxu0 0.0
    %1243 = vmatpush2.msra.mxu0 0.0
    %1244 = vmatprep.subr.mxu0 0.0
    %1245 = vmatpush2.msra.mxu0 0.0
    %1246 = vmatprep.subr.mxu0 0.0
    %1247 = vmatpush2.msra.mxu0 0.0
    %1248 = vmatprep.subr.mxu0 0.0
    %1249 = vmatpush2.msra.mxu0 0.0
    %1250 = vmatprep.subr.mxu0 0.0
    %1251 = vmatpush2.msra.mxu0 0.0
    %1252 = vmatprep.subr.mxu0 0.0
    %1253 = vmatpush2.msra.mxu0 0.0
    %1254 = vmatprep.subr.mxu0 0.0
    %1255 = vmatpush2.msra.mxu0 0.0
    %1256 = vmatprep.subr.mxu0 0.0
    %1257 = vmatpush2.msra.mxu0 0.0
    %1258 = vmatprep.subr.mxu0 0.0
    %1259 = vmatpush2.msra.mxu0 0.0
    %1260 = vmatprep.subr.mxu0 0.0
    %1261 = vmatpush2.msra.mxu0 0.0
    %1262 = vmatprep.mubr.f32.mxu0 0.0
    %1263 = vmatmul.mubr.f32.gmra.mxu0 %v1194
    %v1264 = vpop.f32.mrf.mxu0
    %v1265 = vadd.f32 0.0, %v1264
    %v1266 = vpop.f32.mrf.mxu0
    %1267 = vmatprep.mubr.f32.mxu0 0.0
    %1268 = vmatmul.mubr.f32.gmra.mxu0 %v1196
    %v1269 = vpop.f32.mrf.mxu0
    %v1270 = vadd.f32 0.0, %v1269
    %v1271 = vpop.f32.mrf.mxu0
    %1272 = vdwg.mxu0
    %v1273 = vadd.f32 %v1192, %v1265
    %v1274 = vadd.f32 %v1193, %v1270
    %v1275 = vxor.u32 %v1273, 2147483648
    %v1276 = vxor.u32 %v1274, 2147483648
    %v1277 = vmul.f32 %v1275, 1.442695
    %v1278 = vpow.pop %v1277
    %v1279 = vmul.f32 %v1276, 1.442695
    %v1280 = vpow.pop %v1279
    %v1281 = vadd.f32 %v1278, 1.0
    %v1282 = vadd.f32 %v1280, 1.0
    %v1283 = vrcp.pop %v1281
    %v1284 = vmul.f32 1.0, %v1283
    %v1285 = vrcp.pop %v1282
    %v1286 = vmul.f32 1.0, %v1285
    %v1287 = vtanh.pop %v1273
    %v1288 = vtanh.pop %v1274
    %v1289 = vmul.f32 %v1284, %v1166
    %v1290 = vmul.f32 %v1286, %v1167
    %1293 = vrot.lane.b32.xlu0 %v1287, 64
    %v1294 = vpop.permute.xlu0 %1293
    %1295 = vrot.lane.b32.xlu0 %v1288, 64
    %v1296 = vpop.permute.xlu0 %1295
    %v1299 = vmul.f32 %v1284, %v1294
    %v1300 = vmul.f32 %v1286, %v1296
    %1303 = vrot.lane.b32.xlu0 %v1299, 32
    %v1304 = vpop.permute.xlu0 %1303
    %1305 = vrot.lane.b32.xlu0 %v1300, 32
    %v1306 = vpop.permute.xlu0 %1305
    %v1309 = vadd.f32 %v1289, %v1304
    %v1310 = vadd.f32 %v1290, %v1306
    %v1311 = vtanh.pop %v1309
    %v1312 = vtanh.pop %v1310
    %1315 = vrot.lane.b32.xlu0 %v1311, 64
    %v1316 = vpop.permute.xlu0 %1315
    %1317 = vrot.lane.b32.xlu0 %v1312, 64
    %v1318 = vpop.permute.xlu0 %1317
    %v1321 = vmul.f32 %v1284, %v1316
    %v1322 = vmul.f32 %v1286, %v1318
    %1325 = vrot.lane.b32.xlu0 %v1321, 32
    %v1326 = vpop.permute.xlu0 %1325
    %1327 = vrot.lane.b32.xlu0 %v1322, 32
    %v1328 = vpop.permute.xlu0 %1327
    %s1331 = scalar_lea.vmem [#allocation3], 96
    %1332 = vst.msk [vmem:[%s1331] sm:$0xff] %vm326, %v1326
    %1333 = vst.msk [vmem:[%s1331 + $0x8] sm:$0xff] %vm326, %v1328
    %s1334 = scalar_lea.vmem [#allocation2], 112
    %v1335 = vld [vmem:[%s1334] sm:$0xff]
    %v1336 = vld [vmem:[%s1334 + $0x8] sm:$0xff]
    %v1337 = vsel %vm326, %v1326, 0
    %v1339 = vsel %vm326, %v1328, 0
    %1341 = vmatprep.subr.mxu0 0.0
    %1342 = vmatpush1.msra.mxu0 0.0
    %1343 = vmatprep.subr.mxu0 0.0
    %1344 = vmatpush1.msra.mxu0 0.0
    %1345 = vmatprep.subr.mxu0 0.0
    %1346 = vmatpush1.msra.mxu0 0.0
    %1347 = vmatprep.subr.mxu0 0.0
    %1348 = vmatpush1.msra.mxu0 0.0
    %1349 = vmatprep.subr.mxu0 0.0
    %1350 = vmatpush1.msra.mxu0 0.0
    %1351 = vmatprep.subr.mxu0 0.0
    %1352 = vmatpush1.msra.mxu0 0.0
    %1353 = vmatprep.subr.mxu0 0.0
    %1354 = vmatpush1.msra.mxu0 0.0
    %1355 = vmatprep.subr.mxu0 0.0
    %1356 = vmatpush1.msra.mxu0 0.0
    %1357 = vmatprep.subr.mxu0 0.0
    %1358 = vmatpush1.msra.mxu0 0.0
    %1359 = vmatprep.subr.mxu0 0.0
    %1360 = vmatpush1.msra.mxu0 0.0
    %1361 = vmatprep.subr.mxu0 0.0
    %1362 = vmatpush1.msra.mxu0 0.0
    %1363 = vmatprep.subr.mxu0 0.0
    %1364 = vmatpush1.msra.mxu0 0.0
    %1365 = vmatprep.subr.mxu0 0.0
    %1366 = vmatpush1.msra.mxu0 %v319
    %1367 = vmatprep.subr.mxu0 0.0
    %1368 = vmatpush1.msra.mxu0 %v318
    %1369 = vmatprep.subr.mxu0 0.0
    %1370 = vmatpush1.msra.mxu0 %v317
    %1371 = vmatprep.subr.mxu0 0.0
    %1372 = vmatpush1.msra.mxu0 %v316
    %1373 = vmatprep.subr.mxu0 0.0
    %1374 = vmatpush2.msra.mxu0 0.0
    %1375 = vmatprep.subr.mxu0 0.0
    %1376 = vmatpush2.msra.mxu0 0.0
    %1377 = vmatprep.subr.mxu0 0.0
    %1378 = vmatpush2.msra.mxu0 0.0
    %1379 = vmatprep.subr.mxu0 0.0
    %1380 = vmatpush2.msra.mxu0 0.0
    %1381 = vmatprep.subr.mxu0 0.0
    %1382 = vmatpush2.msra.mxu0 0.0
    %1383 = vmatprep.subr.mxu0 0.0
    %1384 = vmatpush2.msra.mxu0 0.0
    %1385 = vmatprep.subr.mxu0 0.0
    %1386 = vmatpush2.msra.mxu0 0.0
    %1387 = vmatprep.subr.mxu0 0.0
    %1388 = vmatpush2.msra.mxu0 0.0
    %1389 = vmatprep.subr.mxu0 0.0
    %1390 = vmatpush2.msra.mxu0 0.0
    %1391 = vmatprep.subr.mxu0 0.0
    %1392 = vmatpush2.msra.mxu0 0.0
    %1393 = vmatprep.subr.mxu0 0.0
    %1394 = vmatpush2.msra.mxu0 0.0
    %1395 = vmatprep.subr.mxu0 0.0
    %1396 = vmatpush2.msra.mxu0 0.0
    %1397 = vmatprep.subr.mxu0 0.0
    %1398 = vmatpush2.msra.mxu0 0.0
    %1399 = vmatprep.subr.mxu0 0.0
    %1400 = vmatpush2.msra.mxu0 0.0
    %1401 = vmatprep.subr.mxu0 0.0
    %1402 = vmatpush2.msra.mxu0 0.0
    %1403 = vmatprep.subr.mxu0 0.0
    %1404 = vmatpush2.msra.mxu0 0.0
    %1405 = vmatprep.mubr.f32.mxu0 0.0
    %1406 = vmatmul.mubr.f32.gmra.mxu0 %v1337
    %v1407 = vpop.f32.mrf.mxu0
    %v1408 = vadd.f32 0.0, %v1407
    %v1409 = vpop.f32.mrf.mxu0
    %1410 = vmatprep.mubr.f32.mxu0 0.0
    %1411 = vmatmul.mubr.f32.gmra.mxu0 %v1339
    %v1412 = vpop.f32.mrf.mxu0
    %v1413 = vadd.f32 0.0, %v1412
    %v1414 = vpop.f32.mrf.mxu0
    %1415 = vdwg.mxu0
    %v1416 = vadd.f32 %v1335, %v1408
    %v1417 = vadd.f32 %v1336, %v1413
    %v1418 = vxor.u32 %v1416, 2147483648
    %v1419 = vxor.u32 %v1417, 2147483648
    %v1420 = vmul.f32 %v1418, 1.442695
    %v1421 = vpow.pop %v1420
    %v1422 = vmul.f32 %v1419, 1.442695
    %v1423 = vpow.pop %v1422
    %v1424 = vadd.f32 %v1421, 1.0
    %v1425 = vadd.f32 %v1423, 1.0
    %v1426 = vrcp.pop %v1424
    %v1427 = vmul.f32 1.0, %v1426
    %v1428 = vrcp.pop %v1425
    %v1429 = vmul.f32 1.0, %v1428
    %v1430 = vtanh.pop %v1416
    %v1431 = vtanh.pop %v1417
    %v1432 = vmul.f32 %v1427, %v1309
    %v1433 = vmul.f32 %v1429, %v1310
    %1436 = vrot.lane.b32.xlu0 %v1430, 64
    %v1437 = vpop.permute.xlu0 %1436
    %1438 = vrot.lane.b32.xlu0 %v1431, 64
    %v1439 = vpop.permute.xlu0 %1438
    %v1442 = vmul.f32 %v1427, %v1437
    %v1443 = vmul.f32 %v1429, %v1439
    %1446 = vrot.lane.b32.xlu0 %v1442, 32
    %v1447 = vpop.permute.xlu0 %1446
    %1448 = vrot.lane.b32.xlu0 %v1443, 32
    %v1449 = vpop.permute.xlu0 %1448
    %v1452 = vadd.f32 %v1432, %v1447
    %v1453 = vadd.f32 %v1433, %v1449
    %v1454 = vtanh.pop %v1452
    %v1455 = vtanh.pop %v1453
    %1458 = vrot.lane.b32.xlu0 %v1454, 64
    %v1459 = vpop.permute.xlu0 %1458
    %1460 = vrot.lane.b32.xlu0 %v1455, 64
    %v1461 = vpop.permute.xlu0 %1460
    %v1464 = vmul.f32 %v1427, %v1459
    %v1465 = vmul.f32 %v1429, %v1461
    %1468 = vrot.lane.b32.xlu0 %v1464, 32
    %v1469 = vpop.permute.xlu0 %1468
    %1470 = vrot.lane.b32.xlu0 %v1465, 32
    %v1471 = vpop.permute.xlu0 %1470
    %s1474 = scalar_lea.vmem [#allocation3], 112
    %1475 = vst.msk [vmem:[%s1474] sm:$0xff] %vm326, %v1469
    %1476 = vst.msk [vmem:[%s1474 + $0x8] sm:$0xff] %vm326, %v1471
    %1477 = vst.msk [vmem:[#allocation11] sm:$0xff] %vm326, %v1469
    %1478 = vst.msk [vmem:[#allocation11 + $0x8] sm:$0xff] %vm326, %v1471
    %1481 = vrot.lane.b32.xlu0 %v1452, 96
    %v1482 = vpop.permute.xlu0 %1481
    %1483 = vrot.lane.b32.xlu0 %v1453, 96
    %v1484 = vpop.permute.xlu0 %1483
    %1487 = vst.msk [vmem:[#allocation13] sm:$0xff] %vm326, %v1482
    %1488 = vst.msk [vmem:[#allocation13 + $0x8] sm:$0xff] %vm326, %v1484
    %v1489 = vld [vmem:[#allocation3] sm:$0xff]
    %v1490 = vld [vmem:[#allocation3 + $0x8] sm:$0xff]
    %v1491 = vld [vmem:[#allocation3 + $0x10] sm:$0xff]
    %v1492 = vld [vmem:[#allocation3 + $0x18] sm:$0xff]
    %v1493 = vld [vmem:[#allocation3 + $0x20] sm:$0xff]
    %v1494 = vld [vmem:[#allocation3 + $0x28] sm:$0xff]
    %v1495 = vld [vmem:[#allocation3 + $0x30] sm:$0xff]
    %v1496 = vld [vmem:[#allocation3 + $0x38] sm:$0xff]
    %v1497 = vld [vmem:[#allocation3 + $0x40] sm:$0xff]
    %v1498 = vld [vmem:[#allocation3 + $0x48] sm:$0xff]
    %v1499 = vld [vmem:[#allocation3 + $0x50] sm:$0xff]
    %v1500 = vld [vmem:[#allocation3 + $0x58] sm:$0xff]
    %v1501 = vld [vmem:[#allocation3 + $0x60] sm:$0xff]
    %v1502 = vld [vmem:[#allocation3 + $0x68] sm:$0xff]
    %v1503 = vld [vmem:[#allocation3 + $0x70] sm:$0xff]
    %v1504 = vld [vmem:[#allocation3 + $0x78] sm:$0xff]
    %v1505 = vld [vmem:[%s6] sm:$0xff]
    %v1506 = vld [vmem:[%s6 + $0x8] sm:$0xff]
    %v1507 = vld [vmem:[%s6 + $0x10] sm:$0xff]
    %v1508 = vld [vmem:[%s6 + $0x18] sm:$0xff]
    %v1509 = vld [vmem:[%s7] sm:$0x1]
    %v1511 = vlaneseq
    %v1512 = vshrl.u32 %v1511, 7
    %v1513 = vsub.s32 0, %v1512
    %v1514 = vrot.slane %v1509, %v1513
    %v1517 = vsel %vm326, %v1489, 0
    %v1520 = vsel %vm326, %v1490, 0
    %v1523 = vsel %vm326, %v1491, 0
    %v1526 = vsel %vm326, %v1492, 0
    %v1529 = vsel %vm326, %v1493, 0
    %v1532 = vsel %vm326, %v1494, 0
    %v1535 = vsel %vm326, %v1495, 0
    %v1538 = vsel %vm326, %v1496, 0
    %v1541 = vsel %vm326, %v1497, 0
    %v1544 = vsel %vm326, %v1498, 0
    %v1547 = vsel %vm326, %v1499, 0
    %v1550 = vsel %vm326, %v1500, 0
    %v1553 = vsel %vm326, %v1501, 0
    %v1556 = vsel %vm326, %v1502, 0
    %v1559 = vsel %vm326, %v1503, 0
    %v1562 = vsel %vm326, %v1504, 0
    %1564 = vmatprep.subr.mxu0 0.0
    %1565 = vmatpush1.msra.mxu0 0.0
    %1566 = vmatprep.subr.mxu0 0.0
    %1567 = vmatpush1.msra.mxu0 0.0
    %1568 = vmatprep.subr.mxu0 0.0
    %1569 = vmatpush1.msra.mxu0 0.0
    %1570 = vmatprep.subr.mxu0 0.0
    %1571 = vmatpush1.msra.mxu0 0.0
    %1572 = vmatprep.subr.mxu0 0.0
    %1573 = vmatpush1.msra.mxu0 0.0
    %1574 = vmatprep.subr.mxu0 0.0
    %1575 = vmatpush1.msra.mxu0 0.0
    %1576 = vmatprep.subr.mxu0 0.0
    %1577 = vmatpush1.msra.mxu0 0.0
    %1578 = vmatprep.subr.mxu0 0.0
    %1579 = vmatpush1.msra.mxu0 0.0
    %1580 = vmatprep.subr.mxu0 0.0
    %1581 = vmatpush1.msra.mxu0 0.0
    %1582 = vmatprep.subr.mxu0 0.0
    %1583 = vmatpush1.msra.mxu0 0.0
    %1584 = vmatprep.subr.mxu0 0.0
    %1585 = vmatpush1.msra.mxu0 0.0
    %1586 = vmatprep.subr.mxu0 0.0
    %1587 = vmatpush1.msra.mxu0 0.0
    %1588 = vmatprep.subr.mxu0 0.0
    %1589 = vmatpush1.msra.mxu0 %v1508
    %1590 = vmatprep.subr.mxu0 0.0
    %1591 = vmatpush1.msra.mxu0 %v1507
    %1592 = vmatprep.subr.mxu0 0.0
    %1593 = vmatpush1.msra.mxu0 %v1506
    %1594 = vmatprep.subr.mxu0 0.0
    %1595 = vmatpush1.msra.mxu0 %v1505
    %1596 = vmatprep.subr.mxu0 0.0
    %1597 = vmatpush2.msra.mxu0 0.0
    %1598 = vmatprep.subr.mxu0 0.0
    %1599 = vmatpush2.msra.mxu0 0.0
    %1600 = vmatprep.subr.mxu0 0.0
    %1601 = vmatpush2.msra.mxu0 0.0
    %1602 = vmatprep.subr.mxu0 0.0
    %1603 = vmatpush2.msra.mxu0 0.0
    %1604 = vmatprep.subr.mxu0 0.0
    %1605 = vmatpush2.msra.mxu0 0.0
    %1606 = vmatprep.subr.mxu0 0.0
    %1607 = vmatpush2.msra.mxu0 0.0
    %1608 = vmatprep.subr.mxu0 0.0
    %1609 = vmatpush2.msra.mxu0 0.0
    %1610 = vmatprep.subr.mxu0 0.0
    %1611 = vmatpush2.msra.mxu0 0.0
    %1612 = vmatprep.subr.mxu0 0.0
    %1613 = vmatpush2.msra.mxu0 0.0
    %1614 = vmatprep.subr.mxu0 0.0
    %1615 = vmatpush2.msra.mxu0 0.0
    %1616 = vmatprep.subr.mxu0 0.0
    %1617 = vmatpush2.msra.mxu0 0.0
    %1618 = vmatprep.subr.mxu0 0.0
    %1619 = vmatpush2.msra.mxu0 0.0
    %1620 = vmatprep.subr.mxu0 0.0
    %1621 = vmatpush2.msra.mxu0 0.0
    %1622 = vmatprep.subr.mxu0 0.0
    %1623 = vmatpush2.msra.mxu0 0.0
    %1624 = vmatprep.subr.mxu0 0.0
    %1625 = vmatpush2.msra.mxu0 0.0
    %1626 = vmatprep.subr.mxu0 0.0
    %1627 = vmatpush2.msra.mxu0 0.0
    %1628 = vmatprep.mubr.f32.mxu0 0.0
    %1629 = vmatmul.mubr.f32.gmra.mxu0 %v1517
    %v1630 = vpop.f32.mrf.mxu0
    %v1631 = vadd.f32 %v1514, %v1630
    %v1632 = vpop.f32.mrf.mxu0
    %1633 = vmatprep.mubr.f32.mxu0 0.0
    %1634 = vmatmul.mubr.f32.gmra.mxu0 %v1520
    %v1635 = vpop.f32.mrf.mxu0
    %v1636 = vadd.f32 %v1514, %v1635
    %v1637 = vpop.f32.mrf.mxu0
    %1638 = vmatprep.mubr.f32.mxu0 0.0
    %1639 = vmatmul.mubr.f32.gmra.mxu0 %v1523
    %v1640 = vpop.f32.mrf.mxu0
    %v1641 = vadd.f32 %v1514, %v1640
    %v1642 = vpop.f32.mrf.mxu0
    %1643 = vmatprep.mubr.f32.mxu0 0.0
    %1644 = vmatmul.mubr.f32.gmra.mxu0 %v1526
    %v1645 = vpop.f32.mrf.mxu0
    %v1646 = vadd.f32 %v1514, %v1645
    %v1647 = vpop.f32.mrf.mxu0
    %1648 = vmatprep.mubr.f32.mxu0 0.0
    %1649 = vmatmul.mubr.f32.gmra.mxu0 %v1529
    %v1650 = vpop.f32.mrf.mxu0
    %v1651 = vadd.f32 %v1514, %v1650
    %v1652 = vpop.f32.mrf.mxu0
    %1653 = vmatprep.mubr.f32.mxu0 0.0
    %1654 = vmatmul.mubr.f32.gmra.mxu0 %v1532
    %v1655 = vpop.f32.mrf.mxu0
    %v1656 = vadd.f32 %v1514, %v1655
    %v1657 = vpop.f32.mrf.mxu0
    %1658 = vmatprep.mubr.f32.mxu0 0.0
    %1659 = vmatmul.mubr.f32.gmra.mxu0 %v1535
    %v1660 = vpop.f32.mrf.mxu0
    %v1661 = vadd.f32 %v1514, %v1660
    %v1662 = vpop.f32.mrf.mxu0
    %1663 = vmatprep.mubr.f32.mxu0 0.0
    %1664 = vmatmul.mubr.f32.gmra.mxu0 %v1538
    %v1665 = vpop.f32.mrf.mxu0
    %v1666 = vadd.f32 %v1514, %v1665
    %v1667 = vpop.f32.mrf.mxu0
    %1668 = vmatprep.mubr.f32.mxu0 0.0
    %1669 = vmatmul.mubr.f32.gmra.mxu0 %v1541
    %v1670 = vpop.f32.mrf.mxu0
    %v1671 = vadd.f32 %v1514, %v1670
    %v1672 = vpop.f32.mrf.mxu0
    %1673 = vmatprep.mubr.f32.mxu0 0.0
    %1674 = vmatmul.mubr.f32.gmra.mxu0 %v1544
    %v1675 = vpop.f32.mrf.mxu0
    %v1676 = vadd.f32 %v1514, %v1675
    %v1677 = vpop.f32.mrf.mxu0
    %1678 = vmatprep.mubr.f32.mxu0 0.0
    %1679 = vmatmul.mubr.f32.gmra.mxu0 %v1547
    %v1680 = vpop.f32.mrf.mxu0
    %v1681 = vadd.f32 %v1514, %v1680
    %v1682 = vpop.f32.mrf.mxu0
    %1683 = vmatprep.mubr.f32.mxu0 0.0
    %1684 = vmatmul.mubr.f32.gmra.mxu0 %v1550
    %v1685 = vpop.f32.mrf.mxu0
    %v1686 = vadd.f32 %v1514, %v1685
    %v1687 = vpop.f32.mrf.mxu0
    %1688 = vmatprep.mubr.f32.mxu0 0.0
    %1689 = vmatmul.mubr.f32.gmra.mxu0 %v1553
    %v1690 = vpop.f32.mrf.mxu0
    %v1691 = vadd.f32 %v1514, %v1690
    %v1692 = vpop.f32.mrf.mxu0
    %1693 = vmatprep.mubr.f32.mxu0 0.0
    %1694 = vmatmul.mubr.f32.gmra.mxu0 %v1556
    %v1695 = vpop.f32.mrf.mxu0
    %v1696 = vadd.f32 %v1514, %v1695
    %v1697 = vpop.f32.mrf.mxu0
    %1698 = vmatprep.mubr.f32.mxu0 0.0
    %1699 = vmatmul.mubr.f32.gmra.mxu0 %v1559
    %v1700 = vpop.f32.mrf.mxu0
    %v1701 = vadd.f32 %v1514, %v1700
    %v1702 = vpop.f32.mrf.mxu0
    %1703 = vmatprep.mubr.f32.mxu0 0.0
    %1704 = vmatmul.mubr.f32.gmra.mxu0 %v1562
    %v1705 = vpop.f32.mrf.mxu0
    %v1706 = vadd.f32 %v1514, %v1705
    %v1707 = vpop.f32.mrf.mxu0
    %1708 = vdwg.mxu0
    %v1709 = vsel %vm106, %v1631, 0.0
    %1710 = vadd.xlane.f32.xlu0 %v1709
    %v1711 = vpop.xlane.xlu0 %1710
    %v1712 = vsel %vm106, %v1636, 0.0
    %1713 = vadd.xlane.f32.xlu0 %v1712
    %v1714 = vpop.xlane.xlu0 %1713
    %v1715 = vsel %vm106, %v1641, 0.0
    %1716 = vadd.xlane.f32.xlu0 %v1715
    %v1717 = vpop.xlane.xlu0 %1716
    %v1718 = vsel %vm106, %v1646, 0.0
    %1719 = vadd.xlane.f32.xlu0 %v1718
    %v1720 = vpop.xlane.xlu0 %1719
    %v1721 = vsel %vm106, %v1651, 0.0
    %1722 = vadd.xlane.f32.xlu0 %v1721
    %v1723 = vpop.xlane.xlu0 %1722
    %v1724 = vsel %vm106, %v1656, 0.0
    %1725 = vadd.xlane.f32.xlu0 %v1724
    %v1726 = vpop.xlane.xlu0 %1725
    %v1727 = vsel %vm106, %v1661, 0.0
    %1728 = vadd.xlane.f32.xlu0 %v1727
    %v1729 = vpop.xlane.xlu0 %1728
    %v1730 = vsel %vm106, %v1666, 0.0
    %1731 = vadd.xlane.f32.xlu0 %v1730
    %v1732 = vpop.xlane.xlu0 %1731
    %v1733 = vsel %vm106, %v1671, 0.0
    %1734 = vadd.xlane.f32.xlu0 %v1733
    %v1735 = vpop.xlane.xlu0 %1734
    %v1736 = vsel %vm106, %v1676, 0.0
    %1737 = vadd.xlane.f32.xlu0 %v1736
    %v1738 = vpop.xlane.xlu0 %1737
    %v1739 = vsel %vm106, %v1681, 0.0
    %1740 = vadd.xlane.f32.xlu0 %v1739
    %v1741 = vpop.xlane.xlu0 %1740
    %v1742 = vsel %vm106, %v1686, 0.0
    %1743 = vadd.xlane.f32.xlu0 %v1742
    %v1744 = vpop.xlane.xlu0 %1743
    %v1745 = vsel %vm106, %v1691, 0.0
    %1746 = vadd.xlane.f32.xlu0 %v1745
    %v1747 = vpop.xlane.xlu0 %1746
    %v1748 = vsel %vm106, %v1696, 0.0
    %1749 = vadd.xlane.f32.xlu0 %v1748
    %v1750 = vpop.xlane.xlu0 %1749
    %v1751 = vsel %vm106, %v1701, 0.0
    %1752 = vadd.xlane.f32.xlu0 %v1751
    %v1753 = vpop.xlane.xlu0 %1752
    %v1754 = vsel %vm106, %v1706, 0.0
    %1755 = vadd.xlane.f32.xlu0 %v1754
    %v1756 = vpop.xlane.xlu0 %1755
    %v1757 = vrcp.pop 16.0
    %v1758 = vmul.f32 %v1711, %v1757
    %v1759 = vmul.f32 %v1714, %v1757
    %v1760 = vmul.f32 %v1717, %v1757
    %v1761 = vmul.f32 %v1720, %v1757
    %v1762 = vmul.f32 %v1723, %v1757
    %v1763 = vmul.f32 %v1726, %v1757
    %v1764 = vmul.f32 %v1729, %v1757
    %v1765 = vmul.f32 %v1732, %v1757
    %v1766 = vmul.f32 %v1735, %v1757
    %v1767 = vmul.f32 %v1738, %v1757
    %v1768 = vmul.f32 %v1741, %v1757
    %v1769 = vmul.f32 %v1744, %v1757
    %v1770 = vmul.f32 %v1747, %v1757
    %v1771 = vmul.f32 %v1750, %v1757
    %v1772 = vmul.f32 %v1753, %v1757
    %v1773 = vmul.f32 %v1756, %v1757
    %v1774 = vsub.f32 %v1631, %v1758
    %v1775 = vsub.f32 %v1636, %v1759
    %v1776 = vsub.f32 %v1641, %v1760
    %v1777 = vsub.f32 %v1646, %v1761
    %v1778 = vsub.f32 %v1651, %v1762
    %v1779 = vsub.f32 %v1656, %v1763
    %v1780 = vsub.f32 %v1661, %v1764
    %v1781 = vsub.f32 %v1666, %v1765
    %v1782 = vsub.f32 %v1671, %v1766
    %v1783 = vsub.f32 %v1676, %v1767
    %v1784 = vsub.f32 %v1681, %v1768
    %v1785 = vsub.f32 %v1686, %v1769
    %v1786 = vsub.f32 %v1691, %v1770
    %v1787 = vsub.f32 %v1696, %v1771
    %v1788 = vsub.f32 %v1701, %v1772
    %v1789 = vsub.f32 %v1706, %v1773
    %v1790 = vmul.f32 %v1774, %v1774
    %v1791 = vmul.f32 %v1775, %v1775
    %v1792 = vmul.f32 %v1776, %v1776
    %v1793 = vmul.f32 %v1777, %v1777
    %v1794 = vmul.f32 %v1778, %v1778
    %v1795 = vmul.f32 %v1779, %v1779
    %v1796 = vmul.f32 %v1780, %v1780
    %v1797 = vmul.f32 %v1781, %v1781
    %v1798 = vmul.f32 %v1782, %v1782
    %v1799 = vmul.f32 %v1783, %v1783
    %v1800 = vmul.f32 %v1784, %v1784
    %v1801 = vmul.f32 %v1785, %v1785
    %v1802 = vmul.f32 %v1786, %v1786
    %v1803 = vmul.f32 %v1787, %v1787
    %v1804 = vmul.f32 %v1788, %v1788
    %v1805 = vmul.f32 %v1789, %v1789
    %v1806 = vsel %vm106, %v1790, 0.0
    %1807 = vadd.xlane.f32.xlu0 %v1806
    %v1808 = vpop.xlane.xlu0 %1807
    %v1809 = vsel %vm106, %v1791, 0.0
    %1810 = vadd.xlane.f32.xlu0 %v1809
    %v1811 = vpop.xlane.xlu0 %1810
    %v1812 = vsel %vm106, %v1792, 0.0
    %1813 = vadd.xlane.f32.xlu0 %v1812
    %v1814 = vpop.xlane.xlu0 %1813
    %v1815 = vsel %vm106, %v1793, 0.0
    %1816 = vadd.xlane.f32.xlu0 %v1815
    %v1817 = vpop.xlane.xlu0 %1816
    %v1818 = vsel %vm106, %v1794, 0.0
    %1819 = vadd.xlane.f32.xlu0 %v1818
    %v1820 = vpop.xlane.xlu0 %1819
    %v1821 = vsel %vm106, %v1795, 0.0
    %1822 = vadd.xlane.f32.xlu0 %v1821
    %v1823 = vpop.xlane.xlu0 %1822
    %v1824 = vsel %vm106, %v1796, 0.0
    %1825 = vadd.xlane.f32.xlu0 %v1824
    %v1826 = vpop.xlane.xlu0 %1825
    %v1827 = vsel %vm106, %v1797, 0.0
    %1828 = vadd.xlane.f32.xlu0 %v1827
    %v1829 = vpop.xlane.xlu0 %1828
    %v1830 = vsel %vm106, %v1798, 0.0
    %1831 = vadd.xlane.f32.xlu0 %v1830
    %v1832 = vpop.xlane.xlu0 %1831
    %v1833 = vsel %vm106, %v1799, 0.0
    %1834 = vadd.xlane.f32.xlu0 %v1833
    %v1835 = vpop.xlane.xlu0 %1834
    %v1836 = vsel %vm106, %v1800, 0.0
    %1837 = vadd.xlane.f32.xlu0 %v1836
    %v1838 = vpop.xlane.xlu0 %1837
    %v1839 = vsel %vm106, %v1801, 0.0
    %1840 = vadd.xlane.f32.xlu0 %v1839
    %v1841 = vpop.xlane.xlu0 %1840
    %v1842 = vsel %vm106, %v1802, 0.0
    %1843 = vadd.xlane.f32.xlu0 %v1842
    %v1844 = vpop.xlane.xlu0 %1843
    %v1845 = vsel %vm106, %v1803, 0.0
    %1846 = vadd.xlane.f32.xlu0 %v1845
    %v1847 = vpop.xlane.xlu0 %1846
    %v1848 = vsel %vm106, %v1804, 0.0
    %1849 = vadd.xlane.f32.xlu0 %v1848
    %v1850 = vpop.xlane.xlu0 %1849
    %v1851 = vsel %vm106, %v1805, 0.0
    %1852 = vadd.xlane.f32.xlu0 %v1851
    %v1853 = vpop.xlane.xlu0 %1852
    %v1854 = vmul.f32 %v1808, %v1757
    %v1855 = vmul.f32 %v1811, %v1757
    %v1856 = vmul.f32 %v1814, %v1757
    %v1857 = vmul.f32 %v1817, %v1757
    %v1858 = vmul.f32 %v1820, %v1757
    %v1859 = vmul.f32 %v1823, %v1757
    %v1860 = vmul.f32 %v1826, %v1757
    %v1861 = vmul.f32 %v1829, %v1757
    %v1862 = vmul.f32 %v1832, %v1757
    %v1863 = vmul.f32 %v1835, %v1757
    %v1864 = vmul.f32 %v1838, %v1757
    %v1865 = vmul.f32 %v1841, %v1757
    %v1866 = vmul.f32 %v1844, %v1757
    %v1867 = vmul.f32 %v1847, %v1757
    %v1868 = vmul.f32 %v1850, %v1757
    %v1869 = vmul.f32 %v1853, %v1757
    %v1870 = vld [vmem:[%s8] sm:$0x1]
    %v1872 = vlaneseq
    %v1873 = vshrl.u32 %v1872, 7
    %v1874 = vsub.s32 0, %v1873
    %v1875 = vrot.slane %v1870, %v1874
    %v1877 = vmul.f32 %v1875, %v1774
    %v1878 = vmul.f32 %v1875, %v1775
    %v1879 = vmul.f32 %v1875, %v1776
    %v1880 = vmul.f32 %v1875, %v1777
    %v1881 = vmul.f32 %v1875, %v1778
    %v1882 = vmul.f32 %v1875, %v1779
    %v1883 = vmul.f32 %v1875, %v1780
    %v1884 = vmul.f32 %v1875, %v1781
    %v1885 = vmul.f32 %v1875, %v1782
    %v1886 = vmul.f32 %v1875, %v1783
    %v1887 = vmul.f32 %v1875, %v1784
    %v1888 = vmul.f32 %v1875, %v1785
    %v1889 = vmul.f32 %v1875, %v1786
    %v1890 = vmul.f32 %v1875, %v1787
    %v1891 = vmul.f32 %v1875, %v1788
    %v1892 = vmul.f32 %v1875, %v1789
    %v1893 = vadd.f32 %v1854, 1e-08
    %v1894 = vadd.f32 %v1855, 1e-08
    %v1895 = vadd.f32 %v1856, 1e-08
    %v1896 = vadd.f32 %v1857, 1e-08
    %v1897 = vadd.f32 %v1858, 1e-08
    %v1898 = vadd.f32 %v1859, 1e-08
    %v1899 = vadd.f32 %v1860, 1e-08
    %v1900 = vadd.f32 %v1861, 1e-08
    %v1901 = vadd.f32 %v1862, 1e-08
    %v1902 = vadd.f32 %v1863, 1e-08
    %v1903 = vadd.f32 %v1864, 1e-08
    %v1904 = vadd.f32 %v1865, 1e-08
    %v1905 = vadd.f32 %v1866, 1e-08
    %v1906 = vadd.f32 %v1867, 1e-08
    %v1907 = vadd.f32 %v1868, 1e-08
    %v1908 = vadd.f32 %v1869, 1e-08
    %v1909 = vrsqrt.pop %v1893
    %v1910 = vrsqrt.pop %v1894
    %v1911 = vrsqrt.pop %v1895
    %v1912 = vrsqrt.pop %v1896
    %v1913 = vrsqrt.pop %v1897
    %v1914 = vrsqrt.pop %v1898
    %v1915 = vrsqrt.pop %v1899
    %v1916 = vrsqrt.pop %v1900
    %v1917 = vrsqrt.pop %v1901
    %v1918 = vrsqrt.pop %v1902
    %v1919 = vrsqrt.pop %v1903
    %v1920 = vrsqrt.pop %v1904
    %v1921 = vrsqrt.pop %v1905
    %v1922 = vrsqrt.pop %v1906
    %v1923 = vrsqrt.pop %v1907
    %v1924 = vrsqrt.pop %v1908
    %v1925 = vmul.f32 %v1877, %v1909
    %v1926 = vmul.f32 %v1878, %v1910
    %v1927 = vmul.f32 %v1879, %v1911
    %v1928 = vmul.f32 %v1880, %v1912
    %v1929 = vmul.f32 %v1881, %v1913
    %v1930 = vmul.f32 %v1882, %v1914
    %v1931 = vmul.f32 %v1883, %v1915
    %v1932 = vmul.f32 %v1884, %v1916
    %v1933 = vmul.f32 %v1885, %v1917
    %v1934 = vmul.f32 %v1886, %v1918
    %v1935 = vmul.f32 %v1887, %v1919
    %v1936 = vmul.f32 %v1888, %v1920
    %v1937 = vmul.f32 %v1889, %v1921
    %v1938 = vmul.f32 %v1890, %v1922
    %v1939 = vmul.f32 %v1891, %v1923
    %v1940 = vmul.f32 %v1892, %v1924
    %v1941 = vld [vmem:[%s9] sm:$0x1]
    %v1943 = vlaneseq
    %v1944 = vshrl.u32 %v1943, 7
    %v1945 = vsub.s32 0, %v1944
    %v1946 = vrot.slane %v1941, %v1945
    %v1948 = vadd.f32 %v1925, %v1946
    %v1949 = vadd.f32 %v1926, %v1946
    %v1950 = vadd.f32 %v1927, %v1946
    %v1951 = vadd.f32 %v1928, %v1946
    %v1952 = vadd.f32 %v1929, %v1946
    %v1953 = vadd.f32 %v1930, %v1946
    %v1954 = vadd.f32 %v1931, %v1946
    %v1955 = vadd.f32 %v1932, %v1946
    %v1956 = vadd.f32 %v1933, %v1946
    %v1957 = vadd.f32 %v1934, %v1946
    %v1958 = vadd.f32 %v1935, %v1946
    %v1959 = vadd.f32 %v1936, %v1946
    %v1960 = vadd.f32 %v1937, %v1946
    %v1961 = vadd.f32 %v1938, %v1946
    %v1962 = vadd.f32 %v1939, %v1946
    %v1963 = vadd.f32 %v1940, %v1946
    %v1964 = vld [vmem:[#allocation4] sm:$0xff]
    %v1965 = vld [vmem:[#allocation4 + $0x8] sm:$0xff]
    %v1966 = vld [vmem:[#allocation4 + $0x10] sm:$0xff]
    %v1967 = vld [vmem:[#allocation4 + $0x18] sm:$0xff]
    %v1968 = vld [vmem:[#allocation4 + $0x20] sm:$0xff]
    %v1969 = vld [vmem:[#allocation4 + $0x28] sm:$0xff]
    %v1970 = vld [vmem:[#allocation4 + $0x30] sm:$0xff]
    %v1971 = vld [vmem:[#allocation4 + $0x38] sm:$0xff]
    %v1972 = vld [vmem:[#allocation4 + $0x40] sm:$0xff]
    %v1973 = vld [vmem:[#allocation4 + $0x48] sm:$0xff]
    %v1974 = vld [vmem:[#allocation4 + $0x50] sm:$0xff]
    %v1975 = vld [vmem:[#allocation4 + $0x58] sm:$0xff]
    %v1976 = vld [vmem:[#allocation4 + $0x60] sm:$0xff]
    %v1977 = vld [vmem:[#allocation4 + $0x68] sm:$0xff]
    %v1978 = vld [vmem:[#allocation4 + $0x70] sm:$0xff]
    %v1979 = vld [vmem:[#allocation4 + $0x78] sm:$0xff]
    %v1980 = vadd.f32 %v1964, %v1948
    %v1981 = vadd.f32 %v1965, %v1949
    %v1982 = vadd.f32 %v1966, %v1950
    %v1983 = vadd.f32 %v1967, %v1951
    %v1984 = vadd.f32 %v1968, %v1952
    %v1985 = vadd.f32 %v1969, %v1953
    %v1986 = vadd.f32 %v1970, %v1954
    %v1987 = vadd.f32 %v1971, %v1955
    %v1988 = vadd.f32 %v1972, %v1956
    %v1989 = vadd.f32 %v1973, %v1957
    %v1990 = vadd.f32 %v1974, %v1958
    %v1991 = vadd.f32 %v1975, %v1959
    %v1992 = vadd.f32 %v1976, %v1960
    %v1993 = vadd.f32 %v1977, %v1961
    %v1994 = vadd.f32 %v1978, %v1962
    %v1995 = vadd.f32 %v1979, %v1963
    %1996 = vst.msk [vmem:[#allocation10] sm:$0xff] %vm106, %v1980
    %1997 = vst.msk [vmem:[#allocation10 + $0x8] sm:$0xff] %vm106, %v1981
    %1998 = vst.msk [vmem:[#allocation10 + $0x10] sm:$0xff] %vm106, %v1982
    %1999 = vst.msk [vmem:[#allocation10 + $0x18] sm:$0xff] %vm106, %v1983
    %2000 = vst.msk [vmem:[#allocation10 + $0x20] sm:$0xff] %vm106, %v1984
    %2001 = vst.msk [vmem:[#allocation10 + $0x28] sm:$0xff] %vm106, %v1985
    %2002 = vst.msk [vmem:[#allocation10 + $0x30] sm:$0xff] %vm106, %v1986
    %2003 = vst.msk [vmem:[#allocation10 + $0x38] sm:$0xff] %vm106, %v1987
    %2004 = vst.msk [vmem:[#allocation10 + $0x40] sm:$0xff] %vm106, %v1988
    %2005 = vst.msk [vmem:[#allocation10 + $0x48] sm:$0xff] %vm106, %v1989
    %2006 = vst.msk [vmem:[#allocation10 + $0x50] sm:$0xff] %vm106, %v1990
    %2007 = vst.msk [vmem:[#allocation10 + $0x58] sm:$0xff] %vm106, %v1991
    %2008 = vst.msk [vmem:[#allocation10 + $0x60] sm:$0xff] %vm106, %v1992
    %2009 = vst.msk [vmem:[#allocation10 + $0x68] sm:$0xff] %vm106, %v1993
    %2010 = vst.msk [vmem:[#allocation10 + $0x70] sm:$0xff] %vm106, %v1994
    %2011 = vst.msk [vmem:[#allocation10 + $0x78] sm:$0xff] %vm106, %v1995
    // Predicated region
    $region54: #{tpu_custom_call.1} parent=1 // pred_check
      _
    $region55: #{tpu_custom_call.1} parent=1 // pred_check_branch
      %2013 = sbr.rel (0) target = $region57
    $region56: #{tpu_custom_call.1} parent=1 // pred_region
      %s2015 = ssub.s32 2048, 2048
      %2016 = vsyncadd [#allocation6], %s2015
      %s2017 = sshll.u32 [#allocation10], 4
      %s2018 = int_to_ptr.vmem [resolvable:$true] %s2017
      %2023 = dma.vmem_to_hbm [thread:$0]  %s2018, 2048, %s10, [#allocation6], 128, 128, 8
    $region57: #{tpu_custom_call.1} parent=1 // pred_fallthru
      _
    // Predicated region
    $region58: #{tpu_custom_call.1} parent=1 // pred_check
      _
    $region59: #{tpu_custom_call.1} parent=1 // pred_check_branch
      %2025 = sbr.rel (0) target = $region61
    $region60: #{tpu_custom_call.1} parent=1 // pred_region
      %s2027 = ssub.s32 256, 256
      %2028 = vsyncadd [#allocation12], %s2027
      %s2029 = sshll.u32 [#allocation11], 4
      %s2030 = int_to_ptr.vmem [resolvable:$true] %s2029
      %2035 = dma.vmem_to_hbm [thread:$0]  %s2030, 256, %s11, [#allocation12], 128, 128, 8
    $region61: #{tpu_custom_call.1} parent=1 // pred_fallthru
      _
    // Predicated region
    $region62: #{tpu_custom_call.1} parent=1 // pred_check
      _
    $region63: #{tpu_custom_call.1} parent=1 // pred_check_branch
      %2037 = sbr.rel (0) target = $region65
    $region64: #{tpu_custom_call.1} parent=1 // pred_region
      %s2039 = ssub.s32 256, 256
      %2040 = vsyncadd [#allocation12], %s2039
      %s2041 = sshll.u32 [#allocation13], 4
      %s2042 = int_to_ptr.vmem [resolvable:$true] %s2041
      %2047 = dma.vmem_to_hbm [thread:$0]  %s2042, 256, %s12, [#allocation12], 128, 128, 8
    $region65: #{tpu_custom_call.1} parent=1 // pred_fallthru
      _
    // Predicated region
    $region66: #{tpu_custom_call.1} parent=1 // pred_check
      _
    $region67: #{tpu_custom_call.1} parent=1 // pred_check_branch
      %2049 = sbr.rel (0) target = $region69
    $region68: #{tpu_custom_call.1} parent=1 // pred_region
      %2050 = dma.done [#allocation6], 2048
    $region69: #{tpu_custom_call.1} parent=1 // pred_fallthru
      _
    // Predicated region
    $region70: #{tpu_custom_call.1} parent=1 // pred_check
      _
    $region71: #{tpu_custom_call.1} parent=1 // pred_check_branch
      %2052 = sbr.rel (0) target = $region73
    $region72: #{tpu_custom_call.1} parent=1 // pred_region
      %2053 = dma.done [#allocation12], 256
    $region73: #{tpu_custom_call.1} parent=1 // pred_fallthru
      _
    // Predicated region
    $region74: #{tpu_custom_call.1} parent=1 // pred_check
      _
    $region75: #{tpu_custom_call.1} parent=1 // pred_check_branch
      %2055 = sbr.rel (0) target = $region77
    $region76: #{tpu_custom_call.1} parent=1 // pred_region
      %2056 = dma.done [#allocation12], 256
    $region77: #{tpu_custom_call.1} parent=1 // pred_fallthru
      _
    %2057 = vsyncpa [#allocation5], 1
    %2058 = vsyncpa [#allocation8], 1
    %2059 = vsyncpa [#allocation6], 1
    %2060 = vsyncpa [#allocation12], 1

</llo_original>
